<compile_context>
chip_gen: v7x
topology: tpu7x:2x2x1
jax: 0.10.0
libtpu: 0.0.40
codegen_flags: <defaults>
</compile_context>

<pallas_src>
import math
from itertools import product

import jax
import jax.numpy as jnp
from jax import lax
from jax.experimental import pallas as pl
from jax.experimental.pallas import tpu as pltpu


# ----------------------------- Pallas kernel ------------------------------- #

def fused_pair_score_kernel(img_ref, ao_ref, wct_ref, wbt_ref,
                            wout_ref, bout_ref, score_ref, acc_ref):
    """One grid step == (pair block p, emb chunk e), whole batch.

    compose (hypernetwork) + comp_network are fused: the per-pair classifier
    chunk is generated in VMEM from the pair-embedding block and consumed
    immediately -- it never touches HBM.  Scores for a pair block accumulate
    over the emb ("arbitrary") axis in a resident f32 VMEM scratch.
    """
    e_idx = pl.program_id(1)
    n_e = pl.num_programs(1)

    B, F = img_ref.shape                    # batch, backbone feature dim
    Ec = wbt_ref.shape[0]                   # emb channels handled this step
    Pb = ao_ref.shape[0]                    # pairs handled this step

    @pl.when(e_idx == 0)
    def _():
        acc_ref[...] = jnp.zeros_like(acc_ref)

    img = img_ref[...]                      # (B, F)      bf16
    ao = ao_ref[...]                        # (Pb, A_pad) bf16, A_pad = ceil(2E+1, 128)

    # ---- compose: generated classifier chunk for this (p, e) tile ----------
    # g[i*F + f, j] = tanh( WcT[(e_base+i)*F + f, :] . ao_j ) == W1_j[f, e_base+i]
    contract = (((1,), (1,)), ((), ()))     # contract the A axis of both operands
    g = jnp.tanh(
        lax.dot_general(wct_ref[...], ao, contract,
                        preferred_element_type=jnp.float32))          # (Ec*F, Pb) f32
    g_bf = g.astype(jnp.bfloat16)           # rated MXU path for the img @ g matmuls
    b1t = lax.dot_general(wbt_ref[...], ao, contract,
                          preferred_element_type=jnp.float32)         # (Ec, Pb) f32

    # ---- comp_network: feat = relu(img @ W1 + b1); score += w_out[e]*feat_e ----
    # Static unroll over the small Ec chunk (8/16) keeps the generated weights
    # free of lane-crossing reshape/transpose inside the kernel.
    acc = acc_ref[...]                      # (B, Pb) f32
    e_base = e_idx * Ec
    for i in range(Ec):                     # Ec is static -> bounded unroll
        g_e = g_bf[i * F:(i + 1) * F, :]                               # (F, Pb)
        h_e = jnp.dot(img, g_e, preferred_element_type=jnp.float32)   # (B, Pb)
        feat_e = jnp.maximum(h_e + b1t[i:i + 1, :], 0.0)
        acc = acc + wout_ref[0, e_base + i] * feat_e                  # SMEM scalar
    acc_ref[...] = acc

    @pl.when(e_idx == n_e - 1)
    def _():
        score_ref[...] = acc_ref[...] + bout_ref[0, 0]                # (B, Pb)


def _round_up(x, m):
    return int(pl.cdiv(x, m) * m)


# ------------------------------ Model wrapper ------------------------------ #

class CompositionalModelPallas:
    """Eval-path (val_forward) of the czsl CompositionalModel."""

    def __init__(self, key, pairs, n_attrs, n_objs, feat_dim, emb_dim,
                 pair_block=128, emb_chunk=16):
        assert pair_block % 128 == 0, "pair block must be a multiple of 128 (lane-dense)"
        assert emb_dim % emb_chunk == 0, "emb_dim must be divisible by emb_chunk"
        self.pairs = list(pairs)
        self.feat_dim = feat_dim
        self.emb_dim = emb_dim
        self.pair_block = pair_block
        self.emb_chunk = emb_chunk
        attrs, objs = zip(*self.pairs)
        self.val_attrs = jnp.asarray(attrs, dtype=jnp.int32)
        self.val_objs = jnp.asarray(objs, dtype=jnp.int32)

        F, E = feat_dim, emb_dim
        A = 2 * E + 1                        # [attr_emb ; obj_emb ; 1]
        self.A = A
        self.A_pad = _round_up(A, 128)       # lane-aligned compose contraction

        ks = jax.random.split(key, 6)
        self.attr_table = jax.random.normal(ks[0], (n_attrs, E), jnp.float32)
        self.obj_table = jax.random.normal(ks[1], (n_objs, E), jnp.float32)
        # Hypernetwork ("compose") params, stored directly in the transposed
        # layout the fused kernel consumes (rows indexed e*F + f); biases are
        # folded in via the trailing ones column of ao.  f32 masters kept for
        # the reference check; padded bf16 copies feed the kernel.
        self.WcT = jax.random.normal(ks[2], (E * F, A), jnp.float32) / math.sqrt(A)
        self.WbT = jax.random.normal(ks[3], (E, A), jnp.float32) / math.sqrt(A)
        self.w_out = jax.random.normal(ks[4], (1, E), jnp.float32) / math.sqrt(E)
        self.b_out = jax.random.normal(ks[5], (1, 1), jnp.float32) * 0.01

        pad_a = ((0, 0), (0, self.A_pad - A))
        self.WcT_k = jnp.pad(self.WcT, pad_a).astype(jnp.bfloat16)    # (E*F, A_pad)
        self.WbT_k = jnp.pad(self.WbT, pad_a).astype(jnp.bfloat16)    # (E,   A_pad)

    # compose inputs: [attr_emb ; obj_emb ; 1] per pair (tiny, done in XLA glue)
    def _pair_embeddings(self):
        ae = jnp.take(self.attr_table, self.val_attrs, axis=0)          # (P, E)
        oe = jnp.take(self.obj_table, self.val_objs, axis=0)            # (P, E)
        ones = jnp.ones((ae.shape[0], 1), jnp.float32)
        return jnp.concatenate([ae, oe, ones], axis=-1)                 # (P, A)

    # ---- val_forward: score every (attr, obj) pair for every image --------
    def val_forward(self, img):
        B = img.shape[0]
        F, E = self.feat_dim, self.emb_dim
        A_pad = self.A_pad
        P = len(self.pairs)
        Pb = self.pair_block
        Ec = self.emb_chunk
        P_pad = _round_up(P, Pb)
        nb = P_pad // Pb
        n_e = E // Ec

        ao = self._pair_embeddings()                                     # (P, A)
        ao = jnp.pad(ao, ((0, P_pad - P), (0, A_pad - self.A)))          # (P_pad, A_pad)
        ao_k = ao.astype(jnp.bfloat16)
        img_k = img.astype(jnp.bfloat16)

        # Grid: pairs (parallel, megacore-shardable) x emb chunks (arbitrary,
        # reduction axis last).  WcT / WbT stream chunk-by-chunk over the emb
        # axis; at toy sizes nb == 1, so WcT streams from HBM exactly once.
        # For very large P one could swap the loop order with a resident
        # (B, P_pad) accumulator to keep WcT single-streamed when nb > 1.
        scores_pad = pl.pallas_call(
            fused_pair_score_kernel,
            out_shape=jax.ShapeDtypeStruct((B, P_pad), jnp.float32),
            grid=(nb, n_e),
            in_specs=[
                pl.BlockSpec((B, F), lambda p, e: (0, 0)),              # img (shared)
                pl.BlockSpec((Pb, A_pad), lambda p, e: (p, 0)),         # pair block
                pl.BlockSpec((Ec * F, A_pad), lambda p, e: (e, 0)),     # hypernet W chunk
                pl.BlockSpec((Ec, A_pad), lambda p, e: (e, 0)),         # hypernet b chunk
                pl.BlockSpec(memory_space=pltpu.MemorySpace.SMEM),      # w_out
                pl.BlockSpec(memory_space=pltpu.MemorySpace.SMEM),      # b_out
            ],
            out_specs=pl.BlockSpec((B, Pb), lambda p, e: (0, p)),
            scratch_shapes=[pltpu.VMEM((B, Pb), jnp.float32)],          # score acc
            compiler_params=pltpu.CompilerParams(
                dimension_semantics=("parallel", "arbitrary")),
        )(img_k, ao_k, self.WcT_k, self.WbT_k, self.w_out, self.b_out)

        pair_scores = scores_pad[:, :P]                                  # (B, P)

        # NOTE: the reference also computes L2-normalised per-pair feats but
        # discards them (returns (None, scores)); that work is skipped here.
        scores = {}
        for i, (attr, obj) in enumerate(self.pairs):
            scores[(attr, obj)] = pair_scores[:, i]
        return None, scores

    # ---- forward (eval-mode branch of the torch module) --------------------
    def forward(self, x):
        # TODO(synk): train_forward / train_forward_softmax (training branch
        # with sampled negatives + cross-entropy) is not exercised here.
        img = x[0]
        loss = jnp.zeros((1,), jnp.float32)
        acc, pred = self.val_forward(img)
        return loss, pred


# ------------------------------ pure-JAX reference ------------------------- #

def _reference_scores(img, ao, wct, wbt, w_out, b_out, *, E, F):
    P = ao.shape[0]
    hp = jax.lax.Precision.HIGHEST
    w1 = jnp.tanh(jnp.dot(ao, wct.T, precision=hp)).reshape(P, E, F)    # [p, e, f]
    b1 = jnp.dot(ao, wbt.T, precision=hp)                               # (P, E)
    h = jnp.einsum('bf,pef->pbe', img, w1, precision=hp) + b1[:, None, :]
    feat = jnp.maximum(h, 0.0)
    return jnp.einsum('pbe,e->pb', feat, w_out[0], precision=hp) + b_out[0, 0]


# ---------------------------------- main ----------------------------------- #

if __name__ == "__main__":
    key = jax.random.PRNGKey(0)
    k_model, k_img = jax.random.split(key)

    # Synthetic "dataset": 6 attrs x 5 objs -> 30 pairs (exercises pair padding).
    attr_names = list(range(6))
    obj_names = list(range(5))
    pairs = list(product(attr_names, obj_names))

    B, F, E = 8, 64, 32      # batch (>= 8 sublanes), backbone-feature dim, emb_dim

    model = CompositionalModelPallas(
        k_model, pairs,
        n_attrs=len(attr_names), n_objs=len(obj_names),
        feat_dim=F, emb_dim=E, pair_block=128, emb_chunk=16)

    img = jax.random.normal(k_img, (B, F), jnp.float32)
    x = (img,)               # x[0] == image features, as in val_forward

    loss, scores = model.forward(x)
    stacked = jnp.stack([scores[p] for p in pairs], axis=1)             # (B, P)
    jax.block_until_ready(stacked)
    jax.block_until_ready(loss)

    assert stacked.shape == (B, len(pairs))
    assert bool(jnp.all(jnp.isfinite(stacked)))

    # Correctness check against a pure-JAX HIGHEST-precision reference.
    # Tolerance tightened vs. the previous version (0.1*max+0.1 -> 0.05*max+0.05)
    # while still absorbing bf16-operand / MXU rounding.
    ao_full = model._pair_embeddings()
    ref = _reference_scores(img, ao_full, model.WcT, model.WbT,
                            model.w_out, model.b_out, E=E, F=F)         # (P, B)
    err = float(jnp.max(jnp.abs(stacked - ref.T)))
    tol = 0.05 * float(jnp.max(jnp.abs(ref))) + 0.05
    assert err <= tol, (err, tol)

    print("KERNEL_OK")
</pallas_src>

<mosaic_0001>
module attributes {stable_mosaic.version = 11 : i64} {
  func.func @fused_pair_score_kernel(%arg0: i32, %arg1: i32, %arg2: memref<8x64xbf16, #tpu.memory_space<vmem>>, %arg3: memref<128x128xbf16, #tpu.memory_space<vmem>>, %arg4: memref<1024x128xbf16, #tpu.memory_space<vmem>>, %arg5: memref<16x128xbf16, #tpu.memory_space<vmem>>, %arg6: memref<1x32xf32, #tpu.memory_space<smem>>, %arg7: memref<1x1xf32, #tpu.memory_space<smem>>, %arg8: memref<8x128xf32, #tpu.memory_space<vmem>>, %arg9: memref<8x128xf32, #tpu.memory_space<vmem>>) attributes {dimension_semantics = [#tpu.dimension_semantics<parallel>, #tpu.dimension_semantics<arbitrary>], iteration_bounds = array<i64: 1, 2>, scalar_prefetch = 0 : i64, scratch_operands = 1 : i64, tpu.core_type = #tpu.core_type<tc>, window_params = [{pipeline_mode = #tpu.pipeline_mode<synchronous>, transform_indices = @transform_0, window_bounds = array<i64: 8, 64>}, {transform_indices = @transform_1, window_bounds = array<i64: 128, 128>}, {transform_indices = @transform_2, window_bounds = array<i64: 1024, 128>}, {transform_indices = @transform_3, window_bounds = array<i64: 16, 128>}, {transform_indices = @transform_4, window_bounds = array<i64: 1, 32>}, {transform_indices = @transform_5, window_bounds = array<i64: 1, 1>}, {transform_indices = @transform_6, window_bounds = array<i64: 8, 128>}]} {
    %c0_i32 = arith.constant 0 : i32
    %0 = arith.cmpi eq, %arg1, %c0_i32 : i32
    %1 = arith.extui %0 : i1 to i32
    %c0_i32_0 = arith.constant 0 : i32
    %2 = arith.cmpi ne, %1, %c0_i32_0 : i32
    scf.if %2 {
      %cst_64 = arith.constant 0.000000e+00 : f32
      %225 = vector.broadcast %cst_64 : f32 to vector<8x128xf32>
      %c0_65 = arith.constant 0 : index
      %c0_66 = arith.constant 0 : index
      %226 = vector.load %arg9[%c0_65, %c0_66] : memref<8x128xf32, #tpu.memory_space<vmem>>, vector<8x128xf32>
      tpu.vector_store %arg9[%c0_65, %c0_66], %225 {strides = array<i32>} : memref<8x128xf32, #tpu.memory_space<vmem>>, vector<8x128xf32>,
    } else {
    }
    %c0 = arith.constant 0 : index
    %c0_1 = arith.constant 0 : index
    %3 = vector.load %arg2[%c0, %c0_1] : memref<8x64xbf16, #tpu.memory_space<vmem>>, vector<8x64xbf16>
    %c0_2 = arith.constant 0 : index
    %c0_3 = arith.constant 0 : index
    %4 = vector.load %arg3[%c0_2, %c0_3] : memref<128x128xbf16, #tpu.memory_space<vmem>>, vector<128x128xbf16>
    %c0_4 = arith.constant 0 : index
    %c0_5 = arith.constant 0 : index
    %5 = vector.load %arg4[%c0_4, %c0_5] : memref<1024x128xbf16, #tpu.memory_space<vmem>>, vector<1024x128xbf16>
    %cst = arith.constant dense<0.000000e+00> : vector<1024x128xf32>
    %6 = tpu.matmul %5, %4, %cst {dimension_numbers = #tpu.dot_dimension_numbers<[1], [1], [0], [0], [0, 0, 1, 0], [], []>} : vector<1024x128xbf16>, vector<128x128xbf16>, vector<1024x128xf32> -> vector<1024x128xf32>
    %7 = math.tanh %6 : vector<1024x128xf32>
    %8 = arith.truncf %7 : vector<1024x128xf32> to vector<1024x128xbf16>
    %c0_6 = arith.constant 0 : index
    %c0_7 = arith.constant 0 : index
    %9 = vector.load %arg5[%c0_6, %c0_7] : memref<16x128xbf16, #tpu.memory_space<vmem>>, vector<16x128xbf16>
    %cst_8 = arith.constant dense<0.000000e+00> : vector<16x128xf32>
    %10 = tpu.matmul %9, %4, %cst_8 {dimension_numbers = #tpu.dot_dimension_numbers<[1], [1], [0], [0], [0, 0, 1, 0], [], []>} : vector<16x128xbf16>, vector<128x128xbf16>, vector<16x128xf32> -> vector<16x128xf32>
    %c0_9 = arith.constant 0 : index
    %c0_10 = arith.constant 0 : index
    %11 = vector.load %arg9[%c0_9, %c0_10] : memref<8x128xf32, #tpu.memory_space<vmem>>, vector<8x128xf32>
    %c16_i32 = arith.constant 16 : i32
    %12 = arith.muli %arg1, %c16_i32 : i32
    %13 = vector.extract_strided_slice %8 {offsets = [0, 0], sizes = [64, 128], strides = [1, 1]} : vector<1024x128xbf16> to vector<64x128xbf16>
    %cst_11 = arith.constant dense<0.000000e+00> : vector<8x128xf32>
    %14 = tpu.matmul %3, %13, %cst_11 {dimension_numbers = #tpu.dot_dimension_numbers<[1], [0], [0], [1], [0, 0, 1, 1], [], []>} : vector<8x64xbf16>, vector<64x128xbf16>, vector<8x128xf32> -> vector<8x128xf32>
    %15 = vector.extract_strided_slice %10 {offsets = [0, 0], sizes = [1, 128], strides = [1, 1]} : vector<16x128xf32> to vector<1x128xf32>
    %16 = vector.broadcast %15 : vector<1x128xf32> to vector<8x128xf32>
    %17 = arith.addf %14, %16 : vector<8x128xf32>
    %cst_12 = arith.constant 0.000000e+00 : f32
    %18 = vector.broadcast %cst_12 : f32 to vector<8x128xf32>
    %19 = arith.maximumf %17, %18 : vector<8x128xf32>
    %c0_i32_13 = arith.constant 0 : i32
    %20 = arith.addi %12, %c0_i32_13 : i32
    %c0_14 = arith.constant 0 : index
    %21 = arith.index_cast %20 : i32 to index
    %22 = memref.load %arg6[%c0_14, %21] : memref<1x32xf32, #tpu.memory_space<smem>>
    %23 = vector.broadcast %22 : f32 to vector<8x128xf32>
    %24 = arith.mulf %23, %19 : vector<8x128xf32>
    %25 = arith.addf %11, %24 : vector<8x128xf32>
    %26 = vector.extract_strided_slice %8 {offsets = [64, 0], sizes = [64, 128], strides = [1, 1]} : vector<1024x128xbf16> to vector<64x128xbf16>
    %cst_15 = arith.constant dense<0.000000e+00> : vector<8x128xf32>
    %27 = tpu.matmul %3, %26, %cst_15 {dimension_numbers = #tpu.dot_dimension_numbers<[1], [0], [0], [1], [0, 0, 1, 1], [], []>} : vector<8x64xbf16>, vector<64x128xbf16>, vector<8x128xf32> -> vector<8x128xf32>
    %28 = vector.extract_strided_slice %10 {offsets = [1, 0], sizes = [1, 128], strides = [1, 1]} : vector<16x128xf32> to vector<1x128xf32>
    %29 = vector.broadcast %28 : vector<1x128xf32> to vector<8x128xf32>
    %30 = arith.addf %27, %29 : vector<8x128xf32>
    %cst_16 = arith.constant 0.000000e+00 : f32
    %31 = vector.broadcast %cst_16 : f32 to vector<8x128xf32>
    %32 = arith.maximumf %30, %31 : vector<8x128xf32>
    %c1_i32 = arith.constant 1 : i32
    %33 = arith.addi %12, %c1_i32 : i32
    %c0_17 = arith.constant 0 : index
    %34 = arith.index_cast %33 : i32 to index
    %35 = memref.load %arg6[%c0_17, %34] : memref<1x32xf32, #tpu.memory_space<smem>>
    %36 = vector.broadcast %35 : f32 to vector<8x128xf32>
    %37 = arith.mulf %36, %32 : vector<8x128xf32>
    %38 = arith.addf %25, %37 : vector<8x128xf32>
    %39 = vector.extract_strided_slice %8 {offsets = [128, 0], sizes = [64, 128], strides = [1, 1]} : vector<1024x128xbf16> to vector<64x128xbf16>
    %cst_18 = arith.constant dense<0.000000e+00> : vector<8x128xf32>
    %40 = tpu.matmul %3, %39, %cst_18 {dimension_numbers = #tpu.dot_dimension_numbers<[1], [0], [0], [1], [0, 0, 1, 1], [], []>} : vector<8x64xbf16>, vector<64x128xbf16>, vector<8x128xf32> -> vector<8x128xf32>
    %41 = vector.extract_strided_slice %10 {offsets = [2, 0], sizes = [1, 128], strides = [1, 1]} : vector<16x128xf32> to vector<1x128xf32>
    %42 = vector.broadcast %41 : vector<1x128xf32> to vector<8x128xf32>
    %43 = arith.addf %40, %42 : vector<8x128xf32>
    %cst_19 = arith.constant 0.000000e+00 : f32
    %44 = vector.broadcast %cst_19 : f32 to vector<8x128xf32>
    %45 = arith.maximumf %43, %44 : vector<8x128xf32>
    %c2_i32 = arith.constant 2 : i32
    %46 = arith.addi %12, %c2_i32 : i32
    %c0_20 = arith.constant 0 : index
    %47 = arith.index_cast %46 : i32 to index
    %48 = memref.load %arg6[%c0_20, %47] : memref<1x32xf32, #tpu.memory_space<smem>>
    %49 = vector.broadcast %48 : f32 to vector<8x128xf32>
    %50 = arith.mulf %49, %45 : vector<8x128xf32>
    %51 = arith.addf %38, %50 : vector<8x128xf32>
    %52 = vector.extract_strided_slice %8 {offsets = [192, 0], sizes = [64, 128], strides = [1, 1]} : vector<1024x128xbf16> to vector<64x128xbf16>
    %cst_21 = arith.constant dense<0.000000e+00> : vector<8x128xf32>
    %53 = tpu.matmul %3, %52, %cst_21 {dimension_numbers = #tpu.dot_dimension_numbers<[1], [0], [0], [1], [0, 0, 1, 1], [], []>} : vector<8x64xbf16>, vector<64x128xbf16>, vector<8x128xf32> -> vector<8x128xf32>
    %54 = vector.extract_strided_slice %10 {offsets = [3, 0], sizes = [1, 128], strides = [1, 1]} : vector<16x128xf32> to vector<1x128xf32>
    %55 = vector.broadcast %54 : vector<1x128xf32> to vector<8x128xf32>
    %56 = arith.addf %53, %55 : vector<8x128xf32>
    %cst_22 = arith.constant 0.000000e+00 : f32
    %57 = vector.broadcast %cst_22 : f32 to vector<8x128xf32>
    %58 = arith.maximumf %56, %57 : vector<8x128xf32>
    %c3_i32 = arith.constant 3 : i32
    %59 = arith.addi %12, %c3_i32 : i32
    %c0_23 = arith.constant 0 : index
    %60 = arith.index_cast %59 : i32 to index
    %61 = memref.load %arg6[%c0_23, %60] : memref<1x32xf32, #tpu.memory_space<smem>>
    %62 = vector.broadcast %61 : f32 to vector<8x128xf32>
    %63 = arith.mulf %62, %58 : vector<8x128xf32>
    %64 = arith.addf %51, %63 : vector<8x128xf32>
    %65 = vector.extract_strided_slice %8 {offsets = [256, 0], sizes = [64, 128], strides = [1, 1]} : vector<1024x128xbf16> to vector<64x128xbf16>
    %cst_24 = arith.constant dense<0.000000e+00> : vector<8x128xf32>
    %66 = tpu.matmul %3, %65, %cst_24 {dimension_numbers = #tpu.dot_dimension_numbers<[1], [0], [0], [1], [0, 0, 1, 1], [], []>} : vector<8x64xbf16>, vector<64x128xbf16>, vector<8x128xf32> -> vector<8x128xf32>
    %67 = vector.extract_strided_slice %10 {offsets = [4, 0], sizes = [1, 128], strides = [1, 1]} : vector<16x128xf32> to vector<1x128xf32>
    %68 = vector.broadcast %67 : vector<1x128xf32> to vector<8x128xf32>
    %69 = arith.addf %66, %68 : vector<8x128xf32>
    %cst_25 = arith.constant 0.000000e+00 : f32
    %70 = vector.broadcast %cst_25 : f32 to vector<8x128xf32>
    %71 = arith.maximumf %69, %70 : vector<8x128xf32>
    %c4_i32 = arith.constant 4 : i32
    %72 = arith.addi %12, %c4_i32 : i32
    %c0_26 = arith.constant 0 : index
    %73 = arith.index_cast %72 : i32 to index
    %74 = memref.load %arg6[%c0_26, %73] : memref<1x32xf32, #tpu.memory_space<smem>>
    %75 = vector.broadcast %74 : f32 to vector<8x128xf32>
    %76 = arith.mulf %75, %71 : vector<8x128xf32>
    %77 = arith.addf %64, %76 : vector<8x128xf32>
    %78 = vector.extract_strided_slice %8 {offsets = [320, 0], sizes = [64, 128], strides = [1, 1]} : vector<1024x128xbf16> to vector<64x128xbf16>
    %cst_27 = arith.constant dense<0.000000e+00> : vector<8x128xf32>
    %79 = tpu.matmul %3, %78, %cst_27 {dimension_numbers = #tpu.dot_dimension_numbers<[1], [0], [0], [1], [0, 0, 1, 1], [], []>} : vector<8x64xbf16>, vector<64x128xbf16>, vector<8x128xf32> -> vector<8x128xf32>
    %80 = vector.extract_strided_slice %10 {offsets = [5, 0], sizes = [1, 128], strides = [1, 1]} : vector<16x128xf32> to vector<1x128xf32>
    %81 = vector.broadcast %80 : vector<1x128xf32> to vector<8x128xf32>
    %82 = arith.addf %79, %81 : vector<8x128xf32>
    %cst_28 = arith.constant 0.000000e+00 : f32
    %83 = vector.broadcast %cst_28 : f32 to vector<8x128xf32>
    %84 = arith.maximumf %82, %83 : vector<8x128xf32>
    %c5_i32 = arith.constant 5 : i32
    %85 = arith.addi %12, %c5_i32 : i32
    %c0_29 = arith.constant 0 : index
    %86 = arith.index_cast %85 : i32 to index
    %87 = memref.load %arg6[%c0_29, %86] : memref<1x32xf32, #tpu.memory_space<smem>>
    %88 = vector.broadcast %87 : f32 to vector<8x128xf32>
    %89 = arith.mulf %88, %84 : vector<8x128xf32>
    %90 = arith.addf %77, %89 : vector<8x128xf32>
    %91 = vector.extract_strided_slice %8 {offsets = [384, 0], sizes = [64, 128], strides = [1, 1]} : vector<1024x128xbf16> to vector<64x128xbf16>
    %cst_30 = arith.constant dense<0.000000e+00> : vector<8x128xf32>
    %92 = tpu.matmul %3, %91, %cst_30 {dimension_numbers = #tpu.dot_dimension_numbers<[1], [0], [0], [1], [0, 0, 1, 1], [], []>} : vector<8x64xbf16>, vector<64x128xbf16>, vector<8x128xf32> -> vector<8x128xf32>
    %93 = vector.extract_strided_slice %10 {offsets = [6, 0], sizes = [1, 128], strides = [1, 1]} : vector<16x128xf32> to vector<1x128xf32>
    %94 = vector.broadcast %93 : vector<1x128xf32> to vector<8x128xf32>
    %95 = arith.addf %92, %94 : vector<8x128xf32>
    %cst_31 = arith.constant 0.000000e+00 : f32
    %96 = vector.broadcast %cst_31 : f32 to vector<8x128xf32>
    %97 = arith.maximumf %95, %96 : vector<8x128xf32>
    %c6_i32 = arith.constant 6 : i32
    %98 = arith.addi %12, %c6_i32 : i32
    %c0_32 = arith.constant 0 : index
    %99 = arith.index_cast %98 : i32 to index
    %100 = memref.load %arg6[%c0_32, %99] : memref<1x32xf32, #tpu.memory_space<smem>>
    %101 = vector.broadcast %100 : f32 to vector<8x128xf32>
    %102 = arith.mulf %101, %97 : vector<8x128xf32>
    %103 = arith.addf %90, %102 : vector<8x128xf32>
    %104 = vector.extract_strided_slice %8 {offsets = [448, 0], sizes = [64, 128], strides = [1, 1]} : vector<1024x128xbf16> to vector<64x128xbf16>
    %cst_33 = arith.constant dense<0.000000e+00> : vector<8x128xf32>
    %105 = tpu.matmul %3, %104, %cst_33 {dimension_numbers = #tpu.dot_dimension_numbers<[1], [0], [0], [1], [0, 0, 1, 1], [], []>} : vector<8x64xbf16>, vector<64x128xbf16>, vector<8x128xf32> -> vector<8x128xf32>
    %106 = vector.extract_strided_slice %10 {offsets = [7, 0], sizes = [1, 128], strides = [1, 1]} : vector<16x128xf32> to vector<1x128xf32>
    %107 = vector.broadcast %106 : vector<1x128xf32> to vector<8x128xf32>
    %108 = arith.addf %105, %107 : vector<8x128xf32>
    %cst_34 = arith.constant 0.000000e+00 : f32
    %109 = vector.broadcast %cst_34 : f32 to vector<8x128xf32>
    %110 = arith.maximumf %108, %109 : vector<8x128xf32>
    %c7_i32 = arith.constant 7 : i32
    %111 = arith.addi %12, %c7_i32 : i32
    %c0_35 = arith.constant 0 : index
    %112 = arith.index_cast %111 : i32 to index
    %113 = memref.load %arg6[%c0_35, %112] : memref<1x32xf32, #tpu.memory_space<smem>>
    %114 = vector.broadcast %113 : f32 to vector<8x128xf32>
    %115 = arith.mulf %114, %110 : vector<8x128xf32>
    %116 = arith.addf %103, %115 : vector<8x128xf32>
    %117 = vector.extract_strided_slice %8 {offsets = [512, 0], sizes = [64, 128], strides = [1, 1]} : vector<1024x128xbf16> to vector<64x128xbf16>
    %cst_36 = arith.constant dense<0.000000e+00> : vector<8x128xf32>
    %118 = tpu.matmul %3, %117, %cst_36 {dimension_numbers = #tpu.dot_dimension_numbers<[1], [0], [0], [1], [0, 0, 1, 1], [], []>} : vector<8x64xbf16>, vector<64x128xbf16>, vector<8x128xf32> -> vector<8x128xf32>
    %119 = vector.extract_strided_slice %10 {offsets = [8, 0], sizes = [1, 128], strides = [1, 1]} : vector<16x128xf32> to vector<1x128xf32>
    %120 = vector.broadcast %119 : vector<1x128xf32> to vector<8x128xf32>
    %121 = arith.addf %118, %120 : vector<8x128xf32>
    %cst_37 = arith.constant 0.000000e+00 : f32
    %122 = vector.broadcast %cst_37 : f32 to vector<8x128xf32>
    %123 = arith.maximumf %121, %122 : vector<8x128xf32>
    %c8_i32 = arith.constant 8 : i32
    %124 = arith.addi %12, %c8_i32 : i32
    %c0_38 = arith.constant 0 : index
    %125 = arith.index_cast %124 : i32 to index
    %126 = memref.load %arg6[%c0_38, %125] : memref<1x32xf32, #tpu.memory_space<smem>>
    %127 = vector.broadcast %126 : f32 to vector<8x128xf32>
    %128 = arith.mulf %127, %123 : vector<8x128xf32>
    %129 = arith.addf %116, %128 : vector<8x128xf32>
    %130 = vector.extract_strided_slice %8 {offsets = [576, 0], sizes = [64, 128], strides = [1, 1]} : vector<1024x128xbf16> to vector<64x128xbf16>
    %cst_39 = arith.constant dense<0.000000e+00> : vector<8x128xf32>
    %131 = tpu.matmul %3, %130, %cst_39 {dimension_numbers = #tpu.dot_dimension_numbers<[1], [0], [0], [1], [0, 0, 1, 1], [], []>} : vector<8x64xbf16>, vector<64x128xbf16>, vector<8x128xf32> -> vector<8x128xf32>
    %132 = vector.extract_strided_slice %10 {offsets = [9, 0], sizes = [1, 128], strides = [1, 1]} : vector<16x128xf32> to vector<1x128xf32>
    %133 = vector.broadcast %132 : vector<1x128xf32> to vector<8x128xf32>
    %134 = arith.addf %131, %133 : vector<8x128xf32>
    %cst_40 = arith.constant 0.000000e+00 : f32
    %135 = vector.broadcast %cst_40 : f32 to vector<8x128xf32>
    %136 = arith.maximumf %134, %135 : vector<8x128xf32>
    %c9_i32 = arith.constant 9 : i32
    %137 = arith.addi %12, %c9_i32 : i32
    %c0_41 = arith.constant 0 : index
    %138 = arith.index_cast %137 : i32 to index
    %139 = memref.load %arg6[%c0_41, %138] : memref<1x32xf32, #tpu.memory_space<smem>>
    %140 = vector.broadcast %139 : f32 to vector<8x128xf32>
    %141 = arith.mulf %140, %136 : vector<8x128xf32>
    %142 = arith.addf %129, %141 : vector<8x128xf32>
    %143 = vector.extract_strided_slice %8 {offsets = [640, 0], sizes = [64, 128], strides = [1, 1]} : vector<1024x128xbf16> to vector<64x128xbf16>
    %cst_42 = arith.constant dense<0.000000e+00> : vector<8x128xf32>
    %144 = tpu.matmul %3, %143, %cst_42 {dimension_numbers = #tpu.dot_dimension_numbers<[1], [0], [0], [1], [0, 0, 1, 1], [], []>} : vector<8x64xbf16>, vector<64x128xbf16>, vector<8x128xf32> -> vector<8x128xf32>
    %145 = vector.extract_strided_slice %10 {offsets = [10, 0], sizes = [1, 128], strides = [1, 1]} : vector<16x128xf32> to vector<1x128xf32>
    %146 = vector.broadcast %145 : vector<1x128xf32> to vector<8x128xf32>
    %147 = arith.addf %144, %146 : vector<8x128xf32>
    %cst_43 = arith.constant 0.000000e+00 : f32
    %148 = vector.broadcast %cst_43 : f32 to vector<8x128xf32>
    %149 = arith.maximumf %147, %148 : vector<8x128xf32>
    %c10_i32 = arith.constant 10 : i32
    %150 = arith.addi %12, %c10_i32 : i32
    %c0_44 = arith.constant 0 : index
    %151 = arith.index_cast %150 : i32 to index
    %152 = memref.load %arg6[%c0_44, %151] : memref<1x32xf32, #tpu.memory_space<smem>>
    %153 = vector.broadcast %152 : f32 to vector<8x128xf32>
    %154 = arith.mulf %153, %149 : vector<8x128xf32>
    %155 = arith.addf %142, %154 : vector<8x128xf32>
    %156 = vector.extract_strided_slice %8 {offsets = [704, 0], sizes = [64, 128], strides = [1, 1]} : vector<1024x128xbf16> to vector<64x128xbf16>
    %cst_45 = arith.constant dense<0.000000e+00> : vector<8x128xf32>
    %157 = tpu.matmul %3, %156, %cst_45 {dimension_numbers = #tpu.dot_dimension_numbers<[1], [0], [0], [1], [0, 0, 1, 1], [], []>} : vector<8x64xbf16>, vector<64x128xbf16>, vector<8x128xf32> -> vector<8x128xf32>
    %158 = vector.extract_strided_slice %10 {offsets = [11, 0], sizes = [1, 128], strides = [1, 1]} : vector<16x128xf32> to vector<1x128xf32>
    %159 = vector.broadcast %158 : vector<1x128xf32> to vector<8x128xf32>
    %160 = arith.addf %157, %159 : vector<8x128xf32>
    %cst_46 = arith.constant 0.000000e+00 : f32
    %161 = vector.broadcast %cst_46 : f32 to vector<8x128xf32>
    %162 = arith.maximumf %160, %161 : vector<8x128xf32>
    %c11_i32 = arith.constant 11 : i32
    %163 = arith.addi %12, %c11_i32 : i32
    %c0_47 = arith.constant 0 : index
    %164 = arith.index_cast %163 : i32 to index
    %165 = memref.load %arg6[%c0_47, %164] : memref<1x32xf32, #tpu.memory_space<smem>>
    %166 = vector.broadcast %165 : f32 to vector<8x128xf32>
    %167 = arith.mulf %166, %162 : vector<8x128xf32>
    %168 = arith.addf %155, %167 : vector<8x128xf32>
    %169 = vector.extract_strided_slice %8 {offsets = [768, 0], sizes = [64, 128], strides = [1, 1]} : vector<1024x128xbf16> to vector<64x128xbf16>
    %cst_48 = arith.constant dense<0.000000e+00> : vector<8x128xf32>
    %170 = tpu.matmul %3, %169, %cst_48 {dimension_numbers = #tpu.dot_dimension_numbers<[1], [0], [0], [1], [0, 0, 1, 1], [], []>} : vector<8x64xbf16>, vector<64x128xbf16>, vector<8x128xf32> -> vector<8x128xf32>
    %171 = vector.extract_strided_slice %10 {offsets = [12, 0], sizes = [1, 128], strides = [1, 1]} : vector<16x128xf32> to vector<1x128xf32>
    %172 = vector.broadcast %171 : vector<1x128xf32> to vector<8x128xf32>
    %173 = arith.addf %170, %172 : vector<8x128xf32>
    %cst_49 = arith.constant 0.000000e+00 : f32
    %174 = vector.broadcast %cst_49 : f32 to vector<8x128xf32>
    %175 = arith.maximumf %173, %174 : vector<8x128xf32>
    %c12_i32 = arith.constant 12 : i32
    %176 = arith.addi %12, %c12_i32 : i32
    %c0_50 = arith.constant 0 : index
    %177 = arith.index_cast %176 : i32 to index
    %178 = memref.load %arg6[%c0_50, %177] : memref<1x32xf32, #tpu.memory_space<smem>>
    %179 = vector.broadcast %178 : f32 to vector<8x128xf32>
    %180 = arith.mulf %179, %175 : vector<8x128xf32>
    %181 = arith.addf %168, %180 : vector<8x128xf32>
    %182 = vector.extract_strided_slice %8 {offsets = [832, 0], sizes = [64, 128], strides = [1, 1]} : vector<1024x128xbf16> to vector<64x128xbf16>
    %cst_51 = arith.constant dense<0.000000e+00> : vector<8x128xf32>
    %183 = tpu.matmul %3, %182, %cst_51 {dimension_numbers = #tpu.dot_dimension_numbers<[1], [0], [0], [1], [0, 0, 1, 1], [], []>} : vector<8x64xbf16>, vector<64x128xbf16>, vector<8x128xf32> -> vector<8x128xf32>
    %184 = vector.extract_strided_slice %10 {offsets = [13, 0], sizes = [1, 128], strides = [1, 1]} : vector<16x128xf32> to vector<1x128xf32>
    %185 = vector.broadcast %184 : vector<1x128xf32> to vector<8x128xf32>
    %186 = arith.addf %183, %185 : vector<8x128xf32>
    %cst_52 = arith.constant 0.000000e+00 : f32
    %187 = vector.broadcast %cst_52 : f32 to vector<8x128xf32>
    %188 = arith.maximumf %186, %187 : vector<8x128xf32>
    %c13_i32 = arith.constant 13 : i32
    %189 = arith.addi %12, %c13_i32 : i32
    %c0_53 = arith.constant 0 : index
    %190 = arith.index_cast %189 : i32 to index
    %191 = memref.load %arg6[%c0_53, %190] : memref<1x32xf32, #tpu.memory_space<smem>>
    %192 = vector.broadcast %191 : f32 to vector<8x128xf32>
    %193 = arith.mulf %192, %188 : vector<8x128xf32>
    %194 = arith.addf %181, %193 : vector<8x128xf32>
    %195 = vector.extract_strided_slice %8 {offsets = [896, 0], sizes = [64, 128], strides = [1, 1]} : vector<1024x128xbf16> to vector<64x128xbf16>
    %cst_54 = arith.constant dense<0.000000e+00> : vector<8x128xf32>
    %196 = tpu.matmul %3, %195, %cst_54 {dimension_numbers = #tpu.dot_dimension_numbers<[1], [0], [0], [1], [0, 0, 1, 1], [], []>} : vector<8x64xbf16>, vector<64x128xbf16>, vector<8x128xf32> -> vector<8x128xf32>
    %197 = vector.extract_strided_slice %10 {offsets = [14, 0], sizes = [1, 128], strides = [1, 1]} : vector<16x128xf32> to vector<1x128xf32>
    %198 = vector.broadcast %197 : vector<1x128xf32> to vector<8x128xf32>
    %199 = arith.addf %196, %198 : vector<8x128xf32>
    %cst_55 = arith.constant 0.000000e+00 : f32
    %200 = vector.broadcast %cst_55 : f32 to vector<8x128xf32>
    %201 = arith.maximumf %199, %200 : vector<8x128xf32>
    %c14_i32 = arith.constant 14 : i32
    %202 = arith.addi %12, %c14_i32 : i32
    %c0_56 = arith.constant 0 : index
    %203 = arith.index_cast %202 : i32 to index
    %204 = memref.load %arg6[%c0_56, %203] : memref<1x32xf32, #tpu.memory_space<smem>>
    %205 = vector.broadcast %204 : f32 to vector<8x128xf32>
    %206 = arith.mulf %205, %201 : vector<8x128xf32>
    %207 = arith.addf %194, %206 : vector<8x128xf32>
    %208 = vector.extract_strided_slice %8 {offsets = [960, 0], sizes = [64, 128], strides = [1, 1]} : vector<1024x128xbf16> to vector<64x128xbf16>
    %cst_57 = arith.constant dense<0.000000e+00> : vector<8x128xf32>
    %209 = tpu.matmul %3, %208, %cst_57 {dimension_numbers = #tpu.dot_dimension_numbers<[1], [0], [0], [1], [0, 0, 1, 1], [], []>} : vector<8x64xbf16>, vector<64x128xbf16>, vector<8x128xf32> -> vector<8x128xf32>
    %210 = vector.extract_strided_slice %10 {offsets = [15, 0], sizes = [1, 128], strides = [1, 1]} : vector<16x128xf32> to vector<1x128xf32>
    %211 = vector.broadcast %210 : vector<1x128xf32> to vector<8x128xf32>
    %212 = arith.addf %209, %211 : vector<8x128xf32>
    %cst_58 = arith.constant 0.000000e+00 : f32
    %213 = vector.broadcast %cst_58 : f32 to vector<8x128xf32>
    %214 = arith.maximumf %212, %213 : vector<8x128xf32>
    %c15_i32 = arith.constant 15 : i32
    %215 = arith.addi %12, %c15_i32 : i32
    %c0_59 = arith.constant 0 : index
    %216 = arith.index_cast %215 : i32 to index
    %217 = memref.load %arg6[%c0_59, %216] : memref<1x32xf32, #tpu.memory_space<smem>>
    %218 = vector.broadcast %217 : f32 to vector<8x128xf32>
    %219 = arith.mulf %218, %214 : vector<8x128xf32>
    %220 = arith.addf %207, %219 : vector<8x128xf32>
    %c0_60 = arith.constant 0 : index
    %c0_61 = arith.constant 0 : index
    %221 = vector.load %arg9[%c0_60, %c0_61] : memref<8x128xf32, #tpu.memory_space<vmem>>, vector<8x128xf32>
    tpu.vector_store %arg9[%c0_60, %c0_61], %220 {strides = array<i32>} : memref<8x128xf32, #tpu.memory_space<vmem>>, vector<8x128xf32>,
    %c1_i32_62 = arith.constant 1 : i32
    %222 = arith.cmpi eq, %arg1, %c1_i32_62 : i32
    %223 = arith.extui %222 : i1 to i32
    %c0_i32_63 = arith.constant 0 : i32
    %224 = arith.cmpi ne, %223, %c0_i32_63 : i32
    scf.if %224 {
      %c0_64 = arith.constant 0 : index
      %c0_65 = arith.constant 0 : index
      %225 = vector.load %arg9[%c0_64, %c0_65] : memref<8x128xf32, #tpu.memory_space<vmem>>, vector<8x128xf32>
      %c0_66 = arith.constant 0 : index
      %c0_67 = arith.constant 0 : index
      %226 = memref.load %arg7[%c0_66, %c0_67] : memref<1x1xf32, #tpu.memory_space<smem>>
      %227 = vector.broadcast %226 : f32 to vector<8x128xf32>
      %228 = arith.addf %225, %227 : vector<8x128xf32>
      %c0_68 = arith.constant 0 : index
      %c0_69 = arith.constant 0 : index
      %229 = vector.load %arg8[%c0_68, %c0_69] : memref<8x128xf32, #tpu.memory_space<vmem>>, vector<8x128xf32>
      tpu.vector_store %arg8[%c0_68, %c0_69], %228 {strides = array<i32>} : memref<8x128xf32, #tpu.memory_space<vmem>>, vector<8x128xf32>,
    } else {
    }
    return
  }
  func.func @transform_0(%arg0: i32, %arg1: i32) -> (i32, i32) {
    %c0_i32 = arith.constant 0 : i32
    %c0_i32_0 = arith.constant 0 : i32
    %c0_i32_1 = arith.constant 0 : i32
    return %c0_i32, %c0_i32_0 : i32, i32
  }
  func.func @transform_1(%arg0: i32, %arg1: i32) -> (i32, i32) {
    %c0_i32 = arith.constant 0 : i32
    %c0_i32_0 = arith.constant 0 : i32
    return %arg0, %c0_i32 : i32, i32
  }
  func.func @transform_2(%arg0: i32, %arg1: i32) -> (i32, i32) {
    %c0_i32 = arith.constant 0 : i32
    %c0_i32_0 = arith.constant 0 : i32
    return %arg1, %c0_i32 : i32, i32
  }
  func.func @transform_3(%arg0: i32, %arg1: i32) -> (i32, i32) {
    %c0_i32 = arith.constant 0 : i32
    %c0_i32_0 = arith.constant 0 : i32
    return %arg1, %c0_i32 : i32, i32
  }
  func.func @transform_4(%arg0: i32, %arg1: i32) -> (i32, i32) {
    %c0_i32 = arith.constant 0 : i32
    %c0_i32_0 = arith.constant 0 : i32
    %c0_i32_1 = arith.constant 0 : i32
    return %c0_i32, %c0_i32_0 : i32, i32
  }
  func.func @transform_5(%arg0: i32, %arg1: i32) -> (i32, i32) {
    %c0_i32 = arith.constant 0 : i32
    %c0_i32_0 = arith.constant 0 : i32
    %c0_i32_1 = arith.constant 0 : i32
    return %c0_i32, %c0_i32_0 : i32, i32
  }
  func.func @transform_6(%arg0: i32, %arg1: i32) -> (i32, i32) {
    %c0_i32 = arith.constant 0 : i32
    %c0_i32_0 = arith.constant 0 : i32
    return %c0_i32, %arg0 : i32, i32
  }
}

</mosaic_0001>

<llo_original>
// kernel: tpu_custom_call.1
$region0: #{tpu_custom_call.1}
  #allocation0 [shape = 'u32[]', space=smem, size = 0x4, offset = 0x4, fixed_abs, tag = 'smem constant byte address 0x4 - core index']
  #allocation1 [shape = 'u32[144,128]{1,0:T(1,128)}', space=vmem, size = 0x12000, scoped, tag = 'internal scratch']
  #allocation2 [shape = 'f32[8,128]{1,0:T(8,128)}', space=vmem, size = 0x1000, scoped, tag = 'scratch operand']
  #allocation3 [shape = 'f32[1,1]{1,0:T(1,128)S(6)}', space=smem, size = 0x200, scoped, tag = 'scoped memory for tpu_custom_call.1']
  %s0 = inlined_call_operand.hbm [shape: bf16[8,64], index: 0, kind: input, shape index: {}]
  %s1 = inlined_call_operand.hbm [shape: bf16[128,128], index: 1, kind: input, shape index: {}]
  %s2 = inlined_call_operand.hbm [shape: bf16[2048,128], index: 2, kind: input, shape index: {}]
  %s3 = inlined_call_operand.hbm [shape: bf16[32,128], index: 3, kind: input, shape index: {}]
  %s4 = inlined_call_operand.vmem [shape: f32[1,32], index: 4, kind: input, shape index: {}]
  %s5 = inlined_call_operand.<no memory space> [shape: f32[1,1], index: 5, kind: input, shape index: {}]
  %s6 = inlined_call_operand.hbm [shape: f32[8,128], index: 6, kind: output, shape index: {}]
  %s7 = sld [smem:[#allocation0]]
  $region85: #{tpu_custom_call.1} parent=0
    _
  %s9 = ssub.s32 1, %s7
  %s10 = scalar_select 0, %s9, %s7
  %11 = sst [smem:[#allocation3]] %s5
  $region1: #{tpu_custom_call.1} parent=0
    #allocation4 [shape = 'u8[2048]{0}', space=vmem, size = 0x800, scoped, tag = 'input window, operand 0, single buffered']
    #allocation5 [shape = 's32[2]{0}', space=sflag, size = 0x8, scoped, tag = 'scoped memory for tpu_custom_call.1']
    #allocation6 [shape = 's32[2]{0}', space=sflag, size = 0x8, scoped, tag = 'scoped memory for tpu_custom_call.1']
    #allocation7 [shape = 's32[2]{0}', space=sflag, size = 0x8, scoped, tag = 'scoped memory for tpu_custom_call.1']
    #allocation8 [shape = 'u8[32768]{0}', space=vmem, size = 0x8000, scoped, tag = 'input window, operand 1, single buffered']
    #allocation9 [shape = 's32[1]{0}', space=sflag, size = 0x4, scoped, tag = 'scoped memory for tpu_custom_call.1']
    #allocation10 [shape = 'u8[524288]{0}', space=vmem, size = 0x80000, scoped, tag = 'input window, operand 2']
    #allocation11 [shape = 'u8[8192]{0}', space=vmem, size = 0x2000, scoped, tag = 'input window, operand 3']
    #allocation12 [shape = 'u8[512]{0}', space=smem, size = 0x200, scoped, tag = 'input window, operand 4, single buffered']
    #allocation13 [shape = 'u8[4096]{0}', space=vmem, size = 0x1000, scoped, tag = 'output window, operand 0, single buffered']
    %12 = vsyncpa [#allocation5], 0
    %13 = vsyncpa [#allocation9], 0
    %14 = vsyncpa [#allocation7], 0
    %15 = vsyncpa [#allocation6], 0
    loop: start=0, step=1, limit=4
    $region2: #{tpu_custom_call.1} parent=1 // loop_pre_header
      _
    $region3: #{tpu_custom_call.1} parent=1 // loop_header
      %s17 = sphi 0, %s21
      %p18 = scmp.ge.s32.totalorder %s17, 4
      %s24 = sphi 0, %s36
      %s25 = sphi 0, %s32
      %s26 = sphi 0, %s24
      %s27 = sphi 0, %s25
      %s28 = sphi 0, %s26
      %s29 = sphi 0, %s27
      %s37 = sphi 0, %s37
      %s39 = sphi 0, %s37
      %s40 = sphi 0, %s39
      %s54 = sphi 0, %s40
      %s60 = sphi 0, %s62
      %s63 = sphi 0, %s60
      %s64 = sphi 0, %s63
      %s80 = sphi 0, %s64
      %s86 = sphi 0, %s88
      %s89 = sphi 0, %s86
      %s90 = sphi 0, %s89
      %s106 = sphi 0, %s90
      %s112 = sphi 0, %s114
      %s115 = sphi 0, %s112
      %s116 = sphi 0, %s115
      %s132 = sphi 0, %s116
      %s136 = sphi 0, %s136
      %s138 = sphi 0, %s136
      %s139 = sphi 0, %s138
      %s153 = sphi 0, %s139
      %s157 = sphi 0, %s157
      %s159 = sphi 0, %s157
      %s160 = sphi 0, %s159
      %s174 = sphi 0, %s160
      %s180 = sphi 0, %s182
      %s183 = sphi 0, %s180
      %s184 = sphi 0, %s183
      %s200 = sphi 0, %s184
    $region4: #{tpu_custom_call.1} parent=1 // loop_header_branch
      %20 = sbr.rel (%p18) target = $region8
    $region5: #{tpu_custom_call.1} parent=1 // loop_body
      %s22 = ssub.s32 %s17, 1
      %s23 = ssub.s32 %s17, 2
      %s30 = sadd.s32 1, %s25
      %p31 = scmp.ge.s32.totalorder %s30, 2
      %s32 = scalar_select %p31, 0, %s30
      %s33 = sadd.s32 1, %s24
      %s34 = scalar_select %p31, %s33, %s24
      %p35 = scmp.ge.s32.totalorder %s34, 1
      %s36 = scalar_select %p35, 0, %s34
      %s38 = sadd.s32 %s37, 1
      %p41 = scmp.eq.s32.totalorder %s17, 1
      %p42 = scmp.ne.s32.totalorder %s37, %s39
      %p43 = scmp.eq.s32.totalorder %s17, 0
      %p44 = por %p42, %p43
      %p45 = scmp.ne.s32.totalorder %s37, %s39
      %p46 = scmp.eq.s32.totalorder %s22, 1
      %p47 = por %p45, %p46
      %p48 = scmp.ne.s32.totalorder %s39, %s40
      %p49 = scmp.eq.s32.totalorder %s22, 0
      %p50 = por %p48, %p49
      %p51 = scmp.ne.s32.totalorder %s39, %s40
      %p52 = scmp.eq.s32.totalorder %s23, 1
      %p53 = por %p51, %p52
      %p55 = scmp.ne.s32.totalorder %s40, %s54
      %p56 = scmp.eq.s32.totalorder %s23, 0
      %p57 = por %p55, %p56
      %s58 = ssub.s32 %s24, %s36
      %p59 = scmp.eq.s32.totalorder %s58, 0
      %s61 = sadd.s32 %s60, 1
      %s62 = scalar_select %p59, %s60, %s61
      %p65 = pneg %p59
      %p66 = scmp.eq.s32.totalorder %s17, 1
      %p67 = por %p65, %p66
      %p68 = scmp.ne.s32.totalorder %s60, %s63
      %p69 = scmp.eq.s32.totalorder %s17, 0
      %p70 = por %p68, %p69
      %p71 = scmp.ne.s32.totalorder %s60, %s63
      %p72 = scmp.eq.s32.totalorder %s22, 1
      %p73 = por %p71, %p72
      %p74 = scmp.ne.s32.totalorder %s63, %s64
      %p75 = scmp.eq.s32.totalorder %s22, 0
      %p76 = por %p74, %p75
      %p77 = scmp.ne.s32.totalorder %s63, %s64
      %p78 = scmp.eq.s32.totalorder %s23, 1
      %p79 = por %p77, %p78
      %p81 = scmp.ne.s32.totalorder %s64, %s80
      %p82 = scmp.eq.s32.totalorder %s23, 0
      %p83 = por %p81, %p82
      %s84 = ssub.s32 %s25, %s32
      %p85 = scmp.eq.s32.totalorder %s84, 0
      %s87 = sadd.s32 %s86, 1
      %s88 = scalar_select %p85, %s86, %s87
      %p91 = pneg %p85
      %p92 = scmp.eq.s32.totalorder %s17, 1
      %p93 = por %p91, %p92
      %p94 = scmp.ne.s32.totalorder %s86, %s89
      %p95 = scmp.eq.s32.totalorder %s17, 0
      %p96 = por %p94, %p95
      %p97 = scmp.ne.s32.totalorder %s86, %s89
      %p98 = scmp.eq.s32.totalorder %s22, 1
      %p99 = por %p97, %p98
      %p100 = scmp.ne.s32.totalorder %s89, %s90
      %p101 = scmp.eq.s32.totalorder %s22, 0
      %p102 = por %p100, %p101
      %p103 = scmp.ne.s32.totalorder %s89, %s90
      %p104 = scmp.eq.s32.totalorder %s23, 1
      %p105 = por %p103, %p104
      %p107 = scmp.ne.s32.totalorder %s90, %s106
      %p108 = scmp.eq.s32.totalorder %s23, 0
      %p109 = por %p107, %p108
      %s110 = ssub.s32 %s25, %s32
      %p111 = scmp.eq.s32.totalorder %s110, 0
      %s113 = sadd.s32 %s112, 1
      %s114 = scalar_select %p111, %s112, %s113
      %p117 = pneg %p111
      %p118 = scmp.eq.s32.totalorder %s17, 1
      %p119 = por %p117, %p118
      %p120 = scmp.ne.s32.totalorder %s112, %s115
      %p121 = scmp.eq.s32.totalorder %s17, 0
      %p122 = por %p120, %p121
      %p123 = scmp.ne.s32.totalorder %s112, %s115
      %p124 = scmp.eq.s32.totalorder %s22, 1
      %p125 = por %p123, %p124
      %p126 = scmp.ne.s32.totalorder %s115, %s116
      %p127 = scmp.eq.s32.totalorder %s22, 0
      %p128 = por %p126, %p127
      %p129 = scmp.ne.s32.totalorder %s115, %s116
      %p130 = scmp.eq.s32.totalorder %s23, 1
      %p131 = por %p129, %p130
      %p133 = scmp.ne.s32.totalorder %s116, %s132
      %p134 = scmp.eq.s32.totalorder %s23, 0
      %p135 = por %p133, %p134
      %s137 = sadd.s32 %s136, 1
      %p140 = scmp.eq.s32.totalorder %s17, 1
      %p141 = scmp.ne.s32.totalorder %s136, %s138
      %p142 = scmp.eq.s32.totalorder %s17, 0
      %p143 = por %p141, %p142
      %p144 = scmp.ne.s32.totalorder %s136, %s138
      %p145 = scmp.eq.s32.totalorder %s22, 1
      %p146 = por %p144, %p145
      %p147 = scmp.ne.s32.totalorder %s138, %s139
      %p148 = scmp.eq.s32.totalorder %s22, 0
      %p149 = por %p147, %p148
      %p150 = scmp.ne.s32.totalorder %s138, %s139
      %p151 = scmp.eq.s32.totalorder %s23, 1
      %p152 = por %p150, %p151
      %p154 = scmp.ne.s32.totalorder %s139, %s153
      %p155 = scmp.eq.s32.totalorder %s23, 0
      %p156 = por %p154, %p155
      %s158 = sadd.s32 %s157, 1
      %p161 = scmp.eq.s32.totalorder %s17, 1
      %p162 = scmp.ne.s32.totalorder %s157, %s159
      %p163 = scmp.eq.s32.totalorder %s17, 0
      %p164 = por %p162, %p163
      %p165 = scmp.ne.s32.totalorder %s157, %s159
      %p166 = scmp.eq.s32.totalorder %s22, 1
      %p167 = por %p165, %p166
      %p168 = scmp.ne.s32.totalorder %s159, %s160
      %p169 = scmp.eq.s32.totalorder %s22, 0
      %p170 = por %p168, %p169
      %p171 = scmp.ne.s32.totalorder %s159, %s160
      %p172 = scmp.eq.s32.totalorder %s23, 1
      %p173 = por %p171, %p172
      %p175 = scmp.ne.s32.totalorder %s160, %s174
      %p176 = scmp.eq.s32.totalorder %s23, 0
      %p177 = por %p175, %p176
      %s178 = ssub.s32 %s24, %s36
      %p179 = scmp.eq.s32.totalorder %s178, 0
      %s181 = sadd.s32 %s180, 1
      %s182 = scalar_select %p179, %s180, %s181
      %p185 = pneg %p179
      %p186 = scmp.eq.s32.totalorder %s17, 1
      %p187 = por %p185, %p186
      %p188 = scmp.ne.s32.totalorder %s180, %s183
      %p189 = scmp.eq.s32.totalorder %s17, 0
      %p190 = por %p188, %p189
      %p191 = scmp.ne.s32.totalorder %s180, %s183
      %p192 = scmp.eq.s32.totalorder %s22, 1
      %p193 = por %p191, %p192
      %p194 = scmp.ne.s32.totalorder %s183, %s184
      %p195 = scmp.eq.s32.totalorder %s22, 0
      %p196 = por %p194, %p195
      %p197 = scmp.ne.s32.totalorder %s183, %s184
      %p198 = scmp.eq.s32.totalorder %s23, 1
      %p199 = por %p197, %p198
      %p201 = scmp.ne.s32.totalorder %s184, %s200
      %p202 = scmp.eq.s32.totalorder %s23, 0
      %p203 = por %p201, %p202
      %p204 = scmp.le.s32.totalorder 1, %s17
      %p205 = scmp.lt.s32.totalorder %s17, 3
      %p206 = pnand %p204, %p205
      %p207 = pneg %p206
      // Predicated region
      $region9: #{tpu_custom_call.1} parent=5 // pred_check
        _
      $region10: #{tpu_custom_call.1} parent=5 // pred_check_branch
        %209 = sbr.rel (%p206) target = $region12
      $region11: #{tpu_custom_call.1} parent=5 // pred_region
        %s210 = ssub.s32 %s17, 1
        // Predicated region
        $region13: #{tpu_custom_call.1} parent=11 // pred_check
          %p211 = pneg %p50
        $region14: #{tpu_custom_call.1} parent=11 // pred_check_branch
          %213 = sbr.rel (%p211) target = $region16
        $region15: #{tpu_custom_call.1} parent=11 // pred_region
          %s215 = ssub.s32 64, 64
          %216 = vsyncadd [#allocation5], %s215
          %s218 = sshll.u32 [#allocation4], 4
          %s219 = int_to_ptr.vmem [resolvable:$true] %s218
          %221 = dma.hbm_to_vmem [thread:$0]  %s0, 64, %s219, [#allocation5]
        $region16: #{tpu_custom_call.1} parent=11 // pred_fallthru
          _
        // Predicated region
        $region17: #{tpu_custom_call.1} parent=11 // pred_check
          %p222 = pneg %p76
        $region18: #{tpu_custom_call.1} parent=11 // pred_check_branch
          %224 = sbr.rel (%p222) target = $region20
        $region19: #{tpu_custom_call.1} parent=11 // pred_region
          %s225 = smul.u32 16, %s26
          %s227 = ssub.s32 1024, 1024
          %228 = vsyncadd [#allocation9], %s227
          %s229 = smul.addr %s225, 64
          %s230 = scalar_lea.hbm %s1, %s229
          %s231 = sshll.u32 [#allocation8], 4
          %s232 = int_to_ptr.vmem [resolvable:$true] %s231
          %237 = dma.hbm_to_vmem [thread:$0]  %s230, 1024, %s232, [#allocation9], 64, 64, 4
        $region20: #{tpu_custom_call.1} parent=11 // pred_fallthru
          _
        // Predicated region
        $region21: #{tpu_custom_call.1} parent=11 // pred_check
          %p238 = pneg %p149
        $region22: #{tpu_custom_call.1} parent=11 // pred_check_branch
          %240 = sbr.rel (%p238) target = $region24
        $region23: #{tpu_custom_call.1} parent=11 // pred_region
          %s242 = ssub.s32 16, 16
          %243 = vsyncadd [#allocation7], %s242
          %s245 = sshll.u32 %s4, 4
          %s246 = int_to_ptr.vmem [resolvable:$true] %s245
          %248 = dma.vmem_to_smem %s246, 16, [#allocation12], [#allocation7]
        $region24: #{tpu_custom_call.1} parent=11 // pred_fallthru
          _
        // Predicated region
        $region25: #{tpu_custom_call.1} parent=11 // pred_check
          %p249 = pneg %p170
        $region26: #{tpu_custom_call.1} parent=11 // pred_check_branch
          %251 = sbr.rel (%p249) target = $region28
        $region27: #{tpu_custom_call.1} parent=11 // pred_region
          _
        $region28: #{tpu_custom_call.1} parent=11 // pred_fallthru
          _
      $region12: #{tpu_custom_call.1} parent=5 // pred_fallthru
        _
      %p252 = scmp.lt.s32.totalorder %s17, 2
      // Predicated region
      $region29: #{tpu_custom_call.1} parent=5 // pred_check
        %p253 = pneg %p252
      $region30: #{tpu_custom_call.1} parent=5 // pred_check_branch
        %255 = sbr.rel (%p253) target = $region32
      $region31: #{tpu_custom_call.1} parent=5 // pred_region
        // Predicated region
        $region33: #{tpu_custom_call.1} parent=31 // pred_check
          %p256 = pneg %p96
        $region34: #{tpu_custom_call.1} parent=31 // pred_check_branch
          %258 = sbr.rel (%p256) target = $region36
        $region35: #{tpu_custom_call.1} parent=31 // pred_region
          %s259 = sand.u32 %s17, 1
          %s260 = scalar_lea.sflag [#allocation5], %s259
          %s261 = sand.u32 %s86, 1
          %s262 = smul.addr %s261, 512
          %s263 = scalar_lea.vmem [#allocation10], %s262
          %s264 = smul.u32 128, %s25
          %s266 = ssub.s32 8192, 8192
          %267 = vsyncadd %s260, %s266
          %s268 = smul.addr %s264, 64
          %s269 = scalar_lea.hbm %s2, %s268
          %s270 = sshll.u32 %s263, 4
          %s271 = int_to_ptr.vmem [resolvable:$true] %s270
          %276 = dma.hbm_to_vmem [thread:$0]  %s269, 8192, %s271, %s260, 64, 64, 4
        $region36: #{tpu_custom_call.1} parent=31 // pred_fallthru
          _
        // Predicated region
        $region37: #{tpu_custom_call.1} parent=31 // pred_check
          %p277 = pneg %p122
        $region38: #{tpu_custom_call.1} parent=31 // pred_check_branch
          %279 = sbr.rel (%p277) target = $region40
        $region39: #{tpu_custom_call.1} parent=31 // pred_region
          %s280 = sand.u32 %s17, 1
          %s281 = scalar_lea.sflag [#allocation5], %s280
          %s282 = sand.u32 %s112, 1
          %s283 = smul.addr %s282, 8
          %s284 = scalar_lea.vmem [#allocation11], %s283
          %s285 = smul.u32 2, %s25
          %s287 = ssub.s32 128, 128
          %288 = vsyncadd %s281, %s287
          %s289 = smul.addr %s285, 64
          %s290 = scalar_lea.hbm %s3, %s289
          %s291 = sshll.u32 %s284, 4
          %s292 = int_to_ptr.vmem [resolvable:$true] %s291
          %297 = dma.hbm_to_vmem [thread:$0]  %s290, 128, %s292, %s281, 64, 64, 4
        $region40: #{tpu_custom_call.1} parent=31 // pred_fallthru
          _
      $region32: #{tpu_custom_call.1} parent=5 // pred_fallthru
        _
      %p298 = scmp.le.s32.totalorder 1, %s17
      %p299 = scmp.lt.s32.totalorder %s17, 3
      %p300 = pnand %p298, %p299
      %p301 = pneg %p300
      // Predicated region
      $region41: #{tpu_custom_call.1} parent=5 // pred_check
        _
      $region42: #{tpu_custom_call.1} parent=5 // pred_check_branch
        %303 = sbr.rel (%p300) target = $region44
      $region43: #{tpu_custom_call.1} parent=5 // pred_region
        %s304 = ssub.s32 %s17, 1
        // Predicated region
        $region45: #{tpu_custom_call.1} parent=43 // pred_check
          %p305 = pneg %p50
        $region46: #{tpu_custom_call.1} parent=43 // pred_check_branch
          %307 = sbr.rel (%p305) target = $region48
        $region47: #{tpu_custom_call.1} parent=43 // pred_region
          %308 = dma.done [#allocation5], 64
        $region48: #{tpu_custom_call.1} parent=43 // pred_fallthru
          _
        // Predicated region
        $region49: #{tpu_custom_call.1} parent=43 // pred_check
          %p309 = pneg %p76
        $region50: #{tpu_custom_call.1} parent=43 // pred_check_branch
          %311 = sbr.rel (%p309) target = $region52
        $region51: #{tpu_custom_call.1} parent=43 // pred_region
          %312 = dma.done [#allocation9], 1024
        $region52: #{tpu_custom_call.1} parent=43 // pred_fallthru
          _
        %s313 = sand.u32 %s22, 1
        %s314 = scalar_lea.sflag [#allocation5], %s313
        %s315 = sand.u32 %s89, 1
        %s316 = smul.addr %s315, 512
        %s317 = scalar_lea.vmem [#allocation10], %s316
        // Predicated region
        $region53: #{tpu_custom_call.1} parent=43 // pred_check
          %p318 = pneg %p102
        $region54: #{tpu_custom_call.1} parent=43 // pred_check_branch
          %320 = sbr.rel (%p318) target = $region56
        $region55: #{tpu_custom_call.1} parent=43 // pred_region
          %321 = dma.done %s314, 8192
        $region56: #{tpu_custom_call.1} parent=43 // pred_fallthru
          _
        %s322 = sand.u32 %s22, 1
        %s323 = scalar_lea.sflag [#allocation5], %s322
        %s324 = sand.u32 %s115, 1
        %s325 = smul.addr %s324, 8
        %s326 = scalar_lea.vmem [#allocation11], %s325
        // Predicated region
        $region57: #{tpu_custom_call.1} parent=43 // pred_check
          %p327 = pneg %p128
        $region58: #{tpu_custom_call.1} parent=43 // pred_check_branch
          %329 = sbr.rel (%p327) target = $region60
        $region59: #{tpu_custom_call.1} parent=43 // pred_region
          %330 = dma.done %s323, 128
        $region60: #{tpu_custom_call.1} parent=43 // pred_fallthru
          _
        // Predicated region
        $region61: #{tpu_custom_call.1} parent=43 // pred_check
          %p331 = pneg %p149
        $region62: #{tpu_custom_call.1} parent=43 // pred_check_branch
          %333 = sbr.rel (%p331) target = $region64
        $region63: #{tpu_custom_call.1} parent=43 // pred_region
          %334 = dma.done [#allocation7], 16
        $region64: #{tpu_custom_call.1} parent=43 // pred_fallthru
          _
        %335 = sfence
        %p336 = pneg %p50
        %p337 = pneg %p47
        %p338 = pneg %p76
        %p339 = pneg %p73
        %s340 = sand.u32 %s22, 1
        %s341 = scalar_lea.sflag [#allocation5], %s340
        %s342 = sand.u32 %s89, 1
        %s343 = smul.addr %s342, 512
        %s344 = scalar_lea.vmem [#allocation10], %s343
        %p345 = pneg %p102
        %p346 = pneg %p99
        %s347 = sand.u32 %s22, 1
        %s348 = scalar_lea.sflag [#allocation5], %s347
        %s349 = sand.u32 %s115, 1
        %s350 = smul.addr %s349, 8
        %s351 = scalar_lea.vmem [#allocation11], %s350
        %p352 = pneg %p128
        %p353 = pneg %p125
        %p354 = pneg %p149
        %p355 = pneg %p146
        %p356 = pneg %p170
        %p357 = pneg %p167
        %p358 = pneg %p196
        %p359 = pneg %p193
        %s360 = smul.u32 16, %s26
        %s361 = smul.u32 128, %s27
        %s362 = smul.u32 2, %s27
        %p364 = scmp.eq.s32.totalorder %s27, 0
        // Predicated region
        $region65: #{tpu_custom_call.1} parent=43 // pred_check
          %p365 = pneg %p364
        $region66: #{tpu_custom_call.1} parent=43 // pred_check_branch
          %367 = sbr.rel (%p365) target = $region68
        $region67: #{tpu_custom_call.1} parent=43 // pred_region
          %368 = vst [vmem:[#allocation2] sm:$0xff] 0.0
        $region68: #{tpu_custom_call.1} parent=43 // pred_fallthru
          _
        %v369 = vld [vmem:[#allocation4] sm:$0xf]
        %v370 = vld [vmem:[#allocation8] sm:$0xf]
        %v371 = vld [vmem:[#allocation8 + $0x4] sm:$0xf]
        %v372 = vld [vmem:[#allocation8 + $0x8] sm:$0xf]
        %v373 = vld [vmem:[#allocation8 + $0xc] sm:$0xf]
        %v374 = vld [vmem:[#allocation8 + $0x10] sm:$0xf]
        %v375 = vld [vmem:[#allocation8 + $0x14] sm:$0xf]
        %v376 = vld [vmem:[#allocation8 + $0x18] sm:$0xf]
        %v377 = vld [vmem:[#allocation8 + $0x1c] sm:$0xf]
        %v378 = vld [vmem:[#allocation8 + $0x20] sm:$0xf]
        %v379 = vld [vmem:[#allocation8 + $0x24] sm:$0xf]
        %v380 = vld [vmem:[#allocation8 + $0x28] sm:$0xf]
        %v381 = vld [vmem:[#allocation8 + $0x2c] sm:$0xf]
        %v382 = vld [vmem:[#allocation8 + $0x30] sm:$0xf]
        %v383 = vld [vmem:[#allocation8 + $0x34] sm:$0xf]
        %v384 = vld [vmem:[#allocation8 + $0x38] sm:$0xf]
        %v385 = vld [vmem:[#allocation8 + $0x3c] sm:$0xf]
        %v386 = vld [vmem:[%s317] sm:$0xf]
        %v387 = vld [vmem:[%s317 + $0x4] sm:$0xf]
        %v388 = vld [vmem:[%s317 + $0x8] sm:$0xf]
        %v389 = vld [vmem:[%s317 + $0xc] sm:$0xf]
        %v390 = vld [vmem:[%s317 + $0x10] sm:$0xf]
        %v391 = vld [vmem:[%s317 + $0x14] sm:$0xf]
        %v392 = vld [vmem:[%s317 + $0x18] sm:$0xf]
        %v393 = vld [vmem:[%s317 + $0x1c] sm:$0xf]
        %v394 = vld [vmem:[%s317 + $0x20] sm:$0xf]
        %v395 = vld [vmem:[%s317 + $0x24] sm:$0xf]
        %v396 = vld [vmem:[%s317 + $0x28] sm:$0xf]
        %v397 = vld [vmem:[%s317 + $0x2c] sm:$0xf]
        %v398 = vld [vmem:[%s317 + $0x30] sm:$0xf]
        %v399 = vld [vmem:[%s317 + $0x34] sm:$0xf]
        %v400 = vld [vmem:[%s317 + $0x38] sm:$0xf]
        %v401 = vld [vmem:[%s317 + $0x3c] sm:$0xf]
        %v402 = vld [vmem:[%s317 + $0x40] sm:$0xf]
        %v403 = vld [vmem:[%s317 + $0x44] sm:$0xf]
        %v404 = vld [vmem:[%s317 + $0x48] sm:$0xf]
        %v405 = vld [vmem:[%s317 + $0x4c] sm:$0xf]
        %v406 = vld [vmem:[%s317 + $0x50] sm:$0xf]
        %v407 = vld [vmem:[%s317 + $0x54] sm:$0xf]
        %v408 = vld [vmem:[%s317 + $0x58] sm:$0xf]
        %v409 = vld [vmem:[%s317 + $0x5c] sm:$0xf]
        %v410 = vld [vmem:[%s317 + $0x60] sm:$0xf]
        %v411 = vld [vmem:[%s317 + $0x64] sm:$0xf]
        %v412 = vld [vmem:[%s317 + $0x68] sm:$0xf]
        %v413 = vld [vmem:[%s317 + $0x6c] sm:$0xf]
        %v414 = vld [vmem:[%s317 + $0x70] sm:$0xf]
        %v415 = vld [vmem:[%s317 + $0x74] sm:$0xf]
        %v416 = vld [vmem:[%s317 + $0x78] sm:$0xf]
        %v417 = vld [vmem:[%s317 + $0x7c] sm:$0xf]
        %v418 = vld [vmem:[%s317 + $0x80] sm:$0xf]
        %v419 = vld [vmem:[%s317 + $0x84] sm:$0xf]
        %v420 = vld [vmem:[%s317 + $0x88] sm:$0xf]
        %v421 = vld [vmem:[%s317 + $0x8c] sm:$0xf]
        %v422 = vld [vmem:[%s317 + $0x90] sm:$0xf]
        %v423 = vld [vmem:[%s317 + $0x94] sm:$0xf]
        %v424 = vld [vmem:[%s317 + $0x98] sm:$0xf]
        %v425 = vld [vmem:[%s317 + $0x9c] sm:$0xf]
        %v426 = vld [vmem:[%s317 + $0xa0] sm:$0xf]
        %v427 = vld [vmem:[%s317 + $0xa4] sm:$0xf]
        %v428 = vld [vmem:[%s317 + $0xa8] sm:$0xf]
        %v429 = vld [vmem:[%s317 + $0xac] sm:$0xf]
        %v430 = vld [vmem:[%s317 + $0xb0] sm:$0xf]
        %v431 = vld [vmem:[%s317 + $0xb4] sm:$0xf]
        %v432 = vld [vmem:[%s317 + $0xb8] sm:$0xf]
        %v433 = vld [vmem:[%s317 + $0xbc] sm:$0xf]
        %v434 = vld [vmem:[%s317 + $0xc0] sm:$0xf]
        %v435 = vld [vmem:[%s317 + $0xc4] sm:$0xf]
        %v436 = vld [vmem:[%s317 + $0xc8] sm:$0xf]
        %v437 = vld [vmem:[%s317 + $0xcc] sm:$0xf]
        %v438 = vld [vmem:[%s317 + $0xd0] sm:$0xf]
        %v439 = vld [vmem:[%s317 + $0xd4] sm:$0xf]
        %v440 = vld [vmem:[%s317 + $0xd8] sm:$0xf]
        %v441 = vld [vmem:[%s317 + $0xdc] sm:$0xf]
        %v442 = vld [vmem:[%s317 + $0xe0] sm:$0xf]
        %v443 = vld [vmem:[%s317 + $0xe4] sm:$0xf]
        %v444 = vld [vmem:[%s317 + $0xe8] sm:$0xf]
        %v445 = vld [vmem:[%s317 + $0xec] sm:$0xf]
        %v446 = vld [vmem:[%s317 + $0xf0] sm:$0xf]
        %v447 = vld [vmem:[%s317 + $0xf4] sm:$0xf]
        %v448 = vld [vmem:[%s317 + $0xf8] sm:$0xf]
        %v449 = vld [vmem:[%s317 + $0xfc] sm:$0xf]
        %v450 = vld [vmem:[%s317 + $0x100] sm:$0xf]
        %v451 = vld [vmem:[%s317 + $0x104] sm:$0xf]
        %v452 = vld [vmem:[%s317 + $0x108] sm:$0xf]
        %v453 = vld [vmem:[%s317 + $0x10c] sm:$0xf]
        %v454 = vld [vmem:[%s317 + $0x110] sm:$0xf]
        %v455 = vld [vmem:[%s317 + $0x114] sm:$0xf]
        %v456 = vld [vmem:[%s317 + $0x118] sm:$0xf]
        %v457 = vld [vmem:[%s317 + $0x11c] sm:$0xf]
        %v458 = vld [vmem:[%s317 + $0x120] sm:$0xf]
        %v459 = vld [vmem:[%s317 + $0x124] sm:$0xf]
        %v460 = vld [vmem:[%s317 + $0x128] sm:$0xf]
        %v461 = vld [vmem:[%s317 + $0x12c] sm:$0xf]
        %v462 = vld [vmem:[%s317 + $0x130] sm:$0xf]
        %v463 = vld [vmem:[%s317 + $0x134] sm:$0xf]
        %v464 = vld [vmem:[%s317 + $0x138] sm:$0xf]
        %v465 = vld [vmem:[%s317 + $0x13c] sm:$0xf]
        %v466 = vld [vmem:[%s317 + $0x140] sm:$0xf]
        %v467 = vld [vmem:[%s317 + $0x144] sm:$0xf]
        %v468 = vld [vmem:[%s317 + $0x148] sm:$0xf]
        %v469 = vld [vmem:[%s317 + $0x14c] sm:$0xf]
        %v470 = vld [vmem:[%s317 + $0x150] sm:$0xf]
        %v471 = vld [vmem:[%s317 + $0x154] sm:$0xf]
        %v472 = vld [vmem:[%s317 + $0x158] sm:$0xf]
        %v473 = vld [vmem:[%s317 + $0x15c] sm:$0xf]
        %v474 = vld [vmem:[%s317 + $0x160] sm:$0xf]
        %v475 = vld [vmem:[%s317 + $0x164] sm:$0xf]
        %v476 = vld [vmem:[%s317 + $0x168] sm:$0xf]
        %v477 = vld [vmem:[%s317 + $0x16c] sm:$0xf]
        %v478 = vld [vmem:[%s317 + $0x170] sm:$0xf]
        %v479 = vld [vmem:[%s317 + $0x174] sm:$0xf]
        %v480 = vld [vmem:[%s317 + $0x178] sm:$0xf]
        %v481 = vld [vmem:[%s317 + $0x17c] sm:$0xf]
        %v482 = vld [vmem:[%s317 + $0x180] sm:$0xf]
        %v483 = vld [vmem:[%s317 + $0x184] sm:$0xf]
        %v484 = vld [vmem:[%s317 + $0x188] sm:$0xf]
        %v485 = vld [vmem:[%s317 + $0x18c] sm:$0xf]
        %v486 = vld [vmem:[%s317 + $0x190] sm:$0xf]
        %v487 = vld [vmem:[%s317 + $0x194] sm:$0xf]
        %v488 = vld [vmem:[%s317 + $0x198] sm:$0xf]
        %v489 = vld [vmem:[%s317 + $0x19c] sm:$0xf]
        %v490 = vld [vmem:[%s317 + $0x1a0] sm:$0xf]
        %v491 = vld [vmem:[%s317 + $0x1a4] sm:$0xf]
        %v492 = vld [vmem:[%s317 + $0x1a8] sm:$0xf]
        %v493 = vld [vmem:[%s317 + $0x1ac] sm:$0xf]
        %v494 = vld [vmem:[%s317 + $0x1b0] sm:$0xf]
        %v495 = vld [vmem:[%s317 + $0x1b4] sm:$0xf]
        %v496 = vld [vmem:[%s317 + $0x1b8] sm:$0xf]
        %v497 = vld [vmem:[%s317 + $0x1bc] sm:$0xf]
        %v498 = vld [vmem:[%s317 + $0x1c0] sm:$0xf]
        %v499 = vld [vmem:[%s317 + $0x1c4] sm:$0xf]
        %v500 = vld [vmem:[%s317 + $0x1c8] sm:$0xf]
        %v501 = vld [vmem:[%s317 + $0x1cc] sm:$0xf]
        %v502 = vld [vmem:[%s317 + $0x1d0] sm:$0xf]
        %v503 = vld [vmem:[%s317 + $0x1d4] sm:$0xf]
        %v504 = vld [vmem:[%s317 + $0x1d8] sm:$0xf]
        %v505 = vld [vmem:[%s317 + $0x1dc] sm:$0xf]
        %v506 = vld [vmem:[%s317 + $0x1e0] sm:$0xf]
        %v507 = vld [vmem:[%s317 + $0x1e4] sm:$0xf]
        %v508 = vld [vmem:[%s317 + $0x1e8] sm:$0xf]
        %v509 = vld [vmem:[%s317 + $0x1ec] sm:$0xf]
        %v510 = vld [vmem:[%s317 + $0x1f0] sm:$0xf]
        %v511 = vld [vmem:[%s317 + $0x1f4] sm:$0xf]
        %v512 = vld [vmem:[%s317 + $0x1f8] sm:$0xf]
        %v513 = vld [vmem:[%s317 + $0x1fc] sm:$0xf]
        %v642 = vunpack.c.l.b16 %v386
        %v643 = vunpack.c.l.b16 %v387
        %v644 = vunpack.c.l.b16 %v388
        %v645 = vunpack.c.l.b16 %v389
        %v646 = vunpack.c.l.b16 %v390
        %v647 = vunpack.c.l.b16 %v391
        %v648 = vunpack.c.l.b16 %v392
        %v649 = vunpack.c.l.b16 %v393
        %v650 = vunpack.c.l.b16 %v394
        %v651 = vunpack.c.l.b16 %v395
        %v652 = vunpack.c.l.b16 %v396
        %v653 = vunpack.c.l.b16 %v397
        %v654 = vunpack.c.l.b16 %v398
        %v655 = vunpack.c.l.b16 %v399
        %v656 = vunpack.c.l.b16 %v400
        %v657 = vunpack.c.l.b16 %v401
        %v658 = vunpack.c.l.b16 %v402
        %v659 = vunpack.c.l.b16 %v403
        %v660 = vunpack.c.l.b16 %v404
        %v661 = vunpack.c.l.b16 %v405
        %v662 = vunpack.c.l.b16 %v406
        %v663 = vunpack.c.l.b16 %v407
        %v664 = vunpack.c.l.b16 %v408
        %v665 = vunpack.c.l.b16 %v409
        %v666 = vunpack.c.l.b16 %v410
        %v667 = vunpack.c.l.b16 %v411
        %v668 = vunpack.c.l.b16 %v412
        %v669 = vunpack.c.l.b16 %v413
        %v670 = vunpack.c.l.b16 %v414
        %v671 = vunpack.c.l.b16 %v415
        %v672 = vunpack.c.l.b16 %v416
        %v673 = vunpack.c.l.b16 %v417
        %v674 = vunpack.c.l.b16 %v418
        %v675 = vunpack.c.l.b16 %v419
        %v676 = vunpack.c.l.b16 %v420
        %v677 = vunpack.c.l.b16 %v421
        %v678 = vunpack.c.l.b16 %v422
        %v679 = vunpack.c.l.b16 %v423
        %v680 = vunpack.c.l.b16 %v424
        %v681 = vunpack.c.l.b16 %v425
        %v682 = vunpack.c.l.b16 %v426
        %v683 = vunpack.c.l.b16 %v427
        %v684 = vunpack.c.l.b16 %v428
        %v685 = vunpack.c.l.b16 %v429
        %v686 = vunpack.c.l.b16 %v430
        %v687 = vunpack.c.l.b16 %v431
        %v688 = vunpack.c.l.b16 %v432
        %v689 = vunpack.c.l.b16 %v433
        %v690 = vunpack.c.l.b16 %v434
        %v691 = vunpack.c.l.b16 %v435
        %v692 = vunpack.c.l.b16 %v436
        %v693 = vunpack.c.l.b16 %v437
        %v694 = vunpack.c.l.b16 %v438
        %v695 = vunpack.c.l.b16 %v439
        %v696 = vunpack.c.l.b16 %v440
        %v697 = vunpack.c.l.b16 %v441
        %v698 = vunpack.c.l.b16 %v442
        %v699 = vunpack.c.l.b16 %v443
        %v700 = vunpack.c.l.b16 %v444
        %v701 = vunpack.c.l.b16 %v445
        %v702 = vunpack.c.l.b16 %v446
        %v703 = vunpack.c.l.b16 %v447
        %v704 = vunpack.c.l.b16 %v448
        %v705 = vunpack.c.l.b16 %v449
        %v706 = vunpack.c.l.b16 %v450
        %v707 = vunpack.c.l.b16 %v451
        %v708 = vunpack.c.l.b16 %v452
        %v709 = vunpack.c.l.b16 %v453
        %v710 = vunpack.c.l.b16 %v454
        %v711 = vunpack.c.l.b16 %v455
        %v712 = vunpack.c.l.b16 %v456
        %v713 = vunpack.c.l.b16 %v457
        %v714 = vunpack.c.l.b16 %v458
        %v715 = vunpack.c.l.b16 %v459
        %v716 = vunpack.c.l.b16 %v460
        %v717 = vunpack.c.l.b16 %v461
        %v718 = vunpack.c.l.b16 %v462
        %v719 = vunpack.c.l.b16 %v463
        %v720 = vunpack.c.l.b16 %v464
        %v721 = vunpack.c.l.b16 %v465
        %v722 = vunpack.c.l.b16 %v466
        %v723 = vunpack.c.l.b16 %v467
        %v724 = vunpack.c.l.b16 %v468
        %v725 = vunpack.c.l.b16 %v469
        %v726 = vunpack.c.l.b16 %v470
        %v727 = vunpack.c.l.b16 %v471
        %v728 = vunpack.c.l.b16 %v472
        %v729 = vunpack.c.l.b16 %v473
        %v730 = vunpack.c.l.b16 %v474
        %v731 = vunpack.c.l.b16 %v475
        %v732 = vunpack.c.l.b16 %v476
        %v733 = vunpack.c.l.b16 %v477
        %v734 = vunpack.c.l.b16 %v478
        %v735 = vunpack.c.l.b16 %v479
        %v736 = vunpack.c.l.b16 %v480
        %v737 = vunpack.c.l.b16 %v481
        %v738 = vunpack.c.l.b16 %v482
        %v739 = vunpack.c.l.b16 %v483
        %v740 = vunpack.c.l.b16 %v484
        %v741 = vunpack.c.l.b16 %v485
        %v742 = vunpack.c.l.b16 %v486
        %v743 = vunpack.c.l.b16 %v487
        %v744 = vunpack.c.l.b16 %v488
        %v745 = vunpack.c.l.b16 %v489
        %v746 = vunpack.c.l.b16 %v490
        %v747 = vunpack.c.l.b16 %v491
        %v748 = vunpack.c.l.b16 %v492
        %v749 = vunpack.c.l.b16 %v493
        %v750 = vunpack.c.l.b16 %v494
        %v751 = vunpack.c.l.b16 %v495
        %v752 = vunpack.c.l.b16 %v496
        %v753 = vunpack.c.l.b16 %v497
        %v754 = vunpack.c.l.b16 %v498
        %v755 = vunpack.c.l.b16 %v499
        %v756 = vunpack.c.l.b16 %v500
        %v757 = vunpack.c.l.b16 %v501
        %v758 = vunpack.c.l.b16 %v502
        %v759 = vunpack.c.l.b16 %v503
        %v760 = vunpack.c.l.b16 %v504
        %v761 = vunpack.c.l.b16 %v505
        %v762 = vunpack.c.l.b16 %v506
        %v763 = vunpack.c.l.b16 %v507
        %v764 = vunpack.c.l.b16 %v508
        %v765 = vunpack.c.l.b16 %v509
        %v766 = vunpack.c.l.b16 %v510
        %v767 = vunpack.c.l.b16 %v511
        %v768 = vunpack.c.l.b16 %v512
        %v769 = vunpack.c.l.b16 %v513
        %v770 = vpack.c.b16 %v643, %v642
        %v771 = vpack.c.b16 %v645, %v644
        %v772 = vpack.c.b16 %v647, %v646
        %v773 = vpack.c.b16 %v649, %v648
        %v774 = vpack.c.b16 %v651, %v650
        %v775 = vpack.c.b16 %v653, %v652
        %v776 = vpack.c.b16 %v655, %v654
        %v777 = vpack.c.b16 %v657, %v656
        %v778 = vpack.c.b16 %v659, %v658
        %v779 = vpack.c.b16 %v661, %v660
        %v780 = vpack.c.b16 %v663, %v662
        %v781 = vpack.c.b16 %v665, %v664
        %v782 = vpack.c.b16 %v667, %v666
        %v783 = vpack.c.b16 %v669, %v668
        %v784 = vpack.c.b16 %v671, %v670
        %v785 = vpack.c.b16 %v673, %v672
        %v786 = vpack.c.b16 %v675, %v674
        %v787 = vpack.c.b16 %v677, %v676
        %v788 = vpack.c.b16 %v679, %v678
        %v789 = vpack.c.b16 %v681, %v680
        %v790 = vpack.c.b16 %v683, %v682
        %v791 = vpack.c.b16 %v685, %v684
        %v792 = vpack.c.b16 %v687, %v686
        %v793 = vpack.c.b16 %v689, %v688
        %v794 = vpack.c.b16 %v691, %v690
        %v795 = vpack.c.b16 %v693, %v692
        %v796 = vpack.c.b16 %v695, %v694
        %v797 = vpack.c.b16 %v697, %v696
        %v798 = vpack.c.b16 %v699, %v698
        %v799 = vpack.c.b16 %v701, %v700
        %v800 = vpack.c.b16 %v703, %v702
        %v801 = vpack.c.b16 %v705, %v704
        %v802 = vpack.c.b16 %v707, %v706
        %v803 = vpack.c.b16 %v709, %v708
        %v804 = vpack.c.b16 %v711, %v710
        %v805 = vpack.c.b16 %v713, %v712
        %v806 = vpack.c.b16 %v715, %v714
        %v807 = vpack.c.b16 %v717, %v716
        %v808 = vpack.c.b16 %v719, %v718
        %v809 = vpack.c.b16 %v721, %v720
        %v810 = vpack.c.b16 %v723, %v722
        %v811 = vpack.c.b16 %v725, %v724
        %v812 = vpack.c.b16 %v727, %v726
        %v813 = vpack.c.b16 %v729, %v728
        %v814 = vpack.c.b16 %v731, %v730
        %v815 = vpack.c.b16 %v733, %v732
        %v816 = vpack.c.b16 %v735, %v734
        %v817 = vpack.c.b16 %v737, %v736
        %v818 = vpack.c.b16 %v739, %v738
        %v819 = vpack.c.b16 %v741, %v740
        %v820 = vpack.c.b16 %v743, %v742
        %v821 = vpack.c.b16 %v745, %v744
        %v822 = vpack.c.b16 %v747, %v746
        %v823 = vpack.c.b16 %v749, %v748
        %v824 = vpack.c.b16 %v751, %v750
        %v825 = vpack.c.b16 %v753, %v752
        %v826 = vpack.c.b16 %v755, %v754
        %v827 = vpack.c.b16 %v757, %v756
        %v828 = vpack.c.b16 %v759, %v758
        %v829 = vpack.c.b16 %v761, %v760
        %v830 = vpack.c.b16 %v763, %v762
        %v831 = vpack.c.b16 %v765, %v764
        %v832 = vpack.c.b16 %v767, %v766
        %v833 = vpack.c.b16 %v769, %v768
        %v914 = vunpack.c.l.b16 %v370
        %v915 = vunpack.c.l.b16 %v371
        %v916 = vunpack.c.l.b16 %v372
        %v917 = vunpack.c.l.b16 %v373
        %v918 = vunpack.c.l.b16 %v374
        %v919 = vunpack.c.l.b16 %v375
        %v920 = vunpack.c.l.b16 %v376
        %v921 = vunpack.c.l.b16 %v377
        %v922 = vunpack.c.l.b16 %v378
        %v923 = vunpack.c.l.b16 %v379
        %v924 = vunpack.c.l.b16 %v380
        %v925 = vunpack.c.l.b16 %v381
        %v926 = vunpack.c.l.b16 %v382
        %v927 = vunpack.c.l.b16 %v383
        %v928 = vunpack.c.l.b16 %v384
        %v929 = vunpack.c.l.b16 %v385
        %v930 = vpack.c.b16 %v915, %v914
        %v931 = vpack.c.b16 %v917, %v916
        %v932 = vpack.c.b16 %v919, %v918
        %v933 = vpack.c.b16 %v921, %v920
        %v934 = vpack.c.b16 %v923, %v922
        %v935 = vpack.c.b16 %v925, %v924
        %v936 = vpack.c.b16 %v927, %v926
        %v937 = vpack.c.b16 %v929, %v928
        %946 = vmatprep.subr.bf16.mxu0 0
        %947 = vmatpush1.bf16.xpose.msra.mxu0 %v930
        %948 = vmatprep.subr.bf16.mxu0 0
        %949 = vmatpush1.bf16.xpose.msra.mxu0 %v931
        %950 = vmatprep.subr.bf16.mxu0 0
        %951 = vmatpush1.bf16.xpose.msra.mxu0 %v932
        %952 = vmatprep.subr.bf16.mxu0 0
        %953 = vmatpush1.bf16.xpose.msra.mxu0 %v933
        %954 = vmatprep.subr.bf16.mxu0 0
        %955 = vmatpush1.bf16.xpose.msra.mxu0 %v934
        %956 = vmatprep.subr.bf16.mxu0 0
        %957 = vmatpush1.bf16.xpose.msra.mxu0 %v935
        %958 = vmatprep.subr.bf16.mxu0 0
        %959 = vmatpush1.bf16.xpose.msra.mxu0 %v936
        %960 = vmatprep.subr.bf16.mxu0 0
        %961 = vmatpush1.bf16.xpose.msra.mxu0 %v937
        %962 = vmatprep.subr.bf16.mxu0 0
        %963 = vmatpush1.bf16.xpose.msra.mxu0 0
        %964 = vmatprep.subr.bf16.mxu0 0
        %965 = vmatpush1.bf16.xpose.msra.mxu0 0
        %966 = vmatprep.subr.bf16.mxu0 0
        %967 = vmatpush1.bf16.xpose.msra.mxu0 0
        %968 = vmatprep.subr.bf16.mxu0 0
        %969 = vmatpush1.bf16.xpose.msra.mxu0 0
        %970 = vmatprep.subr.bf16.mxu0 0
        %971 = vmatpush1.bf16.xpose.msra.mxu0 0
        %972 = vmatprep.subr.bf16.mxu0 0
        %973 = vmatpush1.bf16.xpose.msra.mxu0 0
        %974 = vmatprep.subr.bf16.mxu0 0
        %975 = vmatpush1.bf16.xpose.msra.mxu0 0
        %976 = vmatprep.subr.bf16.mxu0 0
        %977 = vmatpush1.bf16.xpose.msra.mxu0 0
        %978 = vmatprep.mubr.bf16.mxu0 0
        %979 = vmatmul.mubr.bf16.gmra.mrb[0].mxu0 %v770
        %v980 = vpop.f32.mrb[0].mxu0
        %v981 = vadd.f32 0.0, %v980
        %v982 = vpop.f32.mrb[0].mxu0
        %v983 = vpop.f32.mrb[0].mxu0
        %v984 = vadd.f32 0.0, %v983
        %v985 = vpop.f32.mrb[0].mxu0
        %986 = vmatprep.mubr.bf16.mxu0 0
        %987 = vmatmul.mubr.bf16.gmra.mrb[0].mxu0 %v771
        %v988 = vpop.f32.mrb[0].mxu0
        %v989 = vadd.f32 0.0, %v988
        %v990 = vpop.f32.mrb[0].mxu0
        %v991 = vpop.f32.mrb[0].mxu0
        %v992 = vadd.f32 0.0, %v991
        %v993 = vpop.f32.mrb[0].mxu0
        %994 = vmatprep.mubr.bf16.mxu0 0
        %995 = vmatmul.mubr.bf16.gmra.mrb[0].mxu0 %v772
        %v996 = vpop.f32.mrb[0].mxu0
        %v997 = vadd.f32 0.0, %v996
        %v998 = vpop.f32.mrb[0].mxu0
        %v999 = vpop.f32.mrb[0].mxu0
        %v1000 = vadd.f32 0.0, %v999
        %v1001 = vpop.f32.mrb[0].mxu0
        %1002 = vmatprep.mubr.bf16.mxu0 0
        %1003 = vmatmul.mubr.bf16.gmra.mrb[0].mxu0 %v773
        %v1004 = vpop.f32.mrb[0].mxu0
        %v1005 = vadd.f32 0.0, %v1004
        %v1006 = vpop.f32.mrb[0].mxu0
        %v1007 = vpop.f32.mrb[0].mxu0
        %v1008 = vadd.f32 0.0, %v1007
        %v1009 = vpop.f32.mrb[0].mxu0
        %1010 = vmatprep.mubr.bf16.mxu0 0
        %1011 = vmatmul.mubr.bf16.gmra.mrb[0].mxu0 %v774
        %v1012 = vpop.f32.mrb[0].mxu0
        %v1013 = vadd.f32 0.0, %v1012
        %v1014 = vpop.f32.mrb[0].mxu0
        %v1015 = vpop.f32.mrb[0].mxu0
        %v1016 = vadd.f32 0.0, %v1015
        %v1017 = vpop.f32.mrb[0].mxu0
        %1018 = vmatprep.mubr.bf16.mxu0 0
        %1019 = vmatmul.mubr.bf16.gmra.mrb[0].mxu0 %v775
        %v1020 = vpop.f32.mrb[0].mxu0
        %v1021 = vadd.f32 0.0, %v1020
        %v1022 = vpop.f32.mrb[0].mxu0
        %v1023 = vpop.f32.mrb[0].mxu0
        %v1024 = vadd.f32 0.0, %v1023
        %v1025 = vpop.f32.mrb[0].mxu0
        %1026 = vmatprep.mubr.bf16.mxu0 0
        %1027 = vmatmul.mubr.bf16.gmra.mrb[0].mxu0 %v776
        %v1028 = vpop.f32.mrb[0].mxu0
        %v1029 = vadd.f32 0.0, %v1028
        %v1030 = vpop.f32.mrb[0].mxu0
        %v1031 = vpop.f32.mrb[0].mxu0
        %v1032 = vadd.f32 0.0, %v1031
        %v1033 = vpop.f32.mrb[0].mxu0
        %1034 = vmatprep.mubr.bf16.mxu0 0
        %1035 = vmatmul.mubr.bf16.gmra.mrb[0].mxu0 %v777
        %v1036 = vpop.f32.mrb[0].mxu0
        %v1037 = vadd.f32 0.0, %v1036
        %v1038 = vpop.f32.mrb[0].mxu0
        %v1039 = vpop.f32.mrb[0].mxu0
        %v1040 = vadd.f32 0.0, %v1039
        %v1041 = vpop.f32.mrb[0].mxu0
        %1042 = vmatprep.mubr.bf16.mxu0 0
        %1043 = vmatmul.mubr.bf16.gmra.mrb[0].mxu0 %v778
        %v1044 = vpop.f32.mrb[0].mxu0
        %v1045 = vadd.f32 0.0, %v1044
        %v1046 = vpop.f32.mrb[0].mxu0
        %v1047 = vpop.f32.mrb[0].mxu0
        %v1048 = vadd.f32 0.0, %v1047
        %v1049 = vpop.f32.mrb[0].mxu0
        %1050 = vmatprep.mubr.bf16.mxu0 0
        %1051 = vmatmul.mubr.bf16.gmra.mrb[0].mxu0 %v779
        %v1052 = vpop.f32.mrb[0].mxu0
        %v1053 = vadd.f32 0.0, %v1052
        %v1054 = vpop.f32.mrb[0].mxu0
        %v1055 = vpop.f32.mrb[0].mxu0
        %v1056 = vadd.f32 0.0, %v1055
        %v1057 = vpop.f32.mrb[0].mxu0
        %1058 = vmatprep.mubr.bf16.mxu0 0
        %1059 = vmatmul.mubr.bf16.gmra.mrb[0].mxu0 %v780
        %v1060 = vpop.f32.mrb[0].mxu0
        %v1061 = vadd.f32 0.0, %v1060
        %v1062 = vpop.f32.mrb[0].mxu0
        %v1063 = vpop.f32.mrb[0].mxu0
        %v1064 = vadd.f32 0.0, %v1063
        %v1065 = vpop.f32.mrb[0].mxu0
        %1066 = vmatprep.mubr.bf16.mxu0 0
        %1067 = vmatmul.mubr.bf16.gmra.mrb[0].mxu0 %v781
        %v1068 = vpop.f32.mrb[0].mxu0
        %v1069 = vadd.f32 0.0, %v1068
        %v1070 = vpop.f32.mrb[0].mxu0
        %v1071 = vpop.f32.mrb[0].mxu0
        %v1072 = vadd.f32 0.0, %v1071
        %v1073 = vpop.f32.mrb[0].mxu0
        %1074 = vmatprep.mubr.bf16.mxu0 0
        %1075 = vmatmul.mubr.bf16.gmra.mrb[0].mxu0 %v782
        %v1076 = vpop.f32.mrb[0].mxu0
        %v1077 = vadd.f32 0.0, %v1076
        %v1078 = vpop.f32.mrb[0].mxu0
        %v1079 = vpop.f32.mrb[0].mxu0
        %v1080 = vadd.f32 0.0, %v1079
        %v1081 = vpop.f32.mrb[0].mxu0
        %1082 = vmatprep.mubr.bf16.mxu0 0
        %1083 = vmatmul.mubr.bf16.gmra.mrb[0].mxu0 %v783
        %v1084 = vpop.f32.mrb[0].mxu0
        %v1085 = vadd.f32 0.0, %v1084
        %v1086 = vpop.f32.mrb[0].mxu0
        %v1087 = vpop.f32.mrb[0].mxu0
        %v1088 = vadd.f32 0.0, %v1087
        %v1089 = vpop.f32.mrb[0].mxu0
        %1090 = vmatprep.mubr.bf16.mxu0 0
        %1091 = vmatmul.mubr.bf16.gmra.mrb[0].mxu0 %v784
        %v1092 = vpop.f32.mrb[0].mxu0
        %v1093 = vadd.f32 0.0, %v1092
        %v1094 = vpop.f32.mrb[0].mxu0
        %v1095 = vpop.f32.mrb[0].mxu0
        %v1096 = vadd.f32 0.0, %v1095
        %v1097 = vpop.f32.mrb[0].mxu0
        %1098 = vmatprep.mubr.bf16.mxu0 0
        %1099 = vmatmul.mubr.bf16.gmra.mrb[0].mxu0 %v785
        %v1100 = vpop.f32.mrb[0].mxu0
        %v1101 = vadd.f32 0.0, %v1100
        %v1102 = vpop.f32.mrb[0].mxu0
        %v1103 = vpop.f32.mrb[0].mxu0
        %v1104 = vadd.f32 0.0, %v1103
        %v1105 = vpop.f32.mrb[0].mxu0
        %1106 = vmatprep.mubr.bf16.mxu0 0
        %1107 = vmatmul.mubr.bf16.gmra.mrb[0].mxu0 %v786
        %v1108 = vpop.f32.mrb[0].mxu0
        %v1109 = vadd.f32 0.0, %v1108
        %v1110 = vpop.f32.mrb[0].mxu0
        %v1111 = vpop.f32.mrb[0].mxu0
        %v1112 = vadd.f32 0.0, %v1111
        %v1113 = vpop.f32.mrb[0].mxu0
        %1114 = vmatprep.mubr.bf16.mxu0 0
        %1115 = vmatmul.mubr.bf16.gmra.mrb[0].mxu0 %v787
        %v1116 = vpop.f32.mrb[0].mxu0
        %v1117 = vadd.f32 0.0, %v1116
        %v1118 = vpop.f32.mrb[0].mxu0
        %v1119 = vpop.f32.mrb[0].mxu0
        %v1120 = vadd.f32 0.0, %v1119
        %v1121 = vpop.f32.mrb[0].mxu0
        %1122 = vmatprep.mubr.bf16.mxu0 0
        %1123 = vmatmul.mubr.bf16.gmra.mrb[0].mxu0 %v788
        %v1124 = vpop.f32.mrb[0].mxu0
        %v1125 = vadd.f32 0.0, %v1124
        %v1126 = vpop.f32.mrb[0].mxu0
        %v1127 = vpop.f32.mrb[0].mxu0
        %v1128 = vadd.f32 0.0, %v1127
        %v1129 = vpop.f32.mrb[0].mxu0
        %1130 = vmatprep.mubr.bf16.mxu0 0
        %1131 = vmatmul.mubr.bf16.gmra.mrb[0].mxu0 %v789
        %v1132 = vpop.f32.mrb[0].mxu0
        %v1133 = vadd.f32 0.0, %v1132
        %v1134 = vpop.f32.mrb[0].mxu0
        %v1135 = vpop.f32.mrb[0].mxu0
        %v1136 = vadd.f32 0.0, %v1135
        %v1137 = vpop.f32.mrb[0].mxu0
        %1138 = vmatprep.mubr.bf16.mxu0 0
        %1139 = vmatmul.mubr.bf16.gmra.mrb[0].mxu0 %v790
        %v1140 = vpop.f32.mrb[0].mxu0
        %v1141 = vadd.f32 0.0, %v1140
        %v1142 = vpop.f32.mrb[0].mxu0
        %v1143 = vpop.f32.mrb[0].mxu0
        %v1144 = vadd.f32 0.0, %v1143
        %v1145 = vpop.f32.mrb[0].mxu0
        %1146 = vmatprep.mubr.bf16.mxu0 0
        %1147 = vmatmul.mubr.bf16.gmra.mrb[0].mxu0 %v791
        %v1148 = vpop.f32.mrb[0].mxu0
        %v1149 = vadd.f32 0.0, %v1148
        %v1150 = vpop.f32.mrb[0].mxu0
        %v1151 = vpop.f32.mrb[0].mxu0
        %v1152 = vadd.f32 0.0, %v1151
        %v1153 = vpop.f32.mrb[0].mxu0
        %1154 = vmatprep.mubr.bf16.mxu0 0
        %1155 = vmatmul.mubr.bf16.gmra.mrb[0].mxu0 %v792
        %v1156 = vpop.f32.mrb[0].mxu0
        %v1157 = vadd.f32 0.0, %v1156
        %v1158 = vpop.f32.mrb[0].mxu0
        %v1159 = vpop.f32.mrb[0].mxu0
        %v1160 = vadd.f32 0.0, %v1159
        %v1161 = vpop.f32.mrb[0].mxu0
        %1162 = vmatprep.mubr.bf16.mxu0 0
        %1163 = vmatmul.mubr.bf16.gmra.mrb[0].mxu0 %v793
        %v1164 = vpop.f32.mrb[0].mxu0
        %v1165 = vadd.f32 0.0, %v1164
        %v1166 = vpop.f32.mrb[0].mxu0
        %v1167 = vpop.f32.mrb[0].mxu0
        %v1168 = vadd.f32 0.0, %v1167
        %v1169 = vpop.f32.mrb[0].mxu0
        %1170 = vmatprep.mubr.bf16.mxu0 0
        %1171 = vmatmul.mubr.bf16.gmra.mrb[0].mxu0 %v794
        %v1172 = vpop.f32.mrb[0].mxu0
        %v1173 = vadd.f32 0.0, %v1172
        %v1174 = vpop.f32.mrb[0].mxu0
        %v1175 = vpop.f32.mrb[0].mxu0
        %v1176 = vadd.f32 0.0, %v1175
        %v1177 = vpop.f32.mrb[0].mxu0
        %1178 = vmatprep.mubr.bf16.mxu0 0
        %1179 = vmatmul.mubr.bf16.gmra.mrb[0].mxu0 %v795
        %v1180 = vpop.f32.mrb[0].mxu0
        %v1181 = vadd.f32 0.0, %v1180
        %v1182 = vpop.f32.mrb[0].mxu0
        %v1183 = vpop.f32.mrb[0].mxu0
        %v1184 = vadd.f32 0.0, %v1183
        %v1185 = vpop.f32.mrb[0].mxu0
        %1186 = vmatprep.mubr.bf16.mxu0 0
        %1187 = vmatmul.mubr.bf16.gmra.mrb[0].mxu0 %v796
        %v1188 = vpop.f32.mrb[0].mxu0
        %v1189 = vadd.f32 0.0, %v1188
        %v1190 = vpop.f32.mrb[0].mxu0
        %v1191 = vpop.f32.mrb[0].mxu0
        %v1192 = vadd.f32 0.0, %v1191
        %v1193 = vpop.f32.mrb[0].mxu0
        %1194 = vmatprep.mubr.bf16.mxu0 0
        %1195 = vmatmul.mubr.bf16.gmra.mrb[0].mxu0 %v797
        %v1196 = vpop.f32.mrb[0].mxu0
        %v1197 = vadd.f32 0.0, %v1196
        %v1198 = vpop.f32.mrb[0].mxu0
        %v1199 = vpop.f32.mrb[0].mxu0
        %v1200 = vadd.f32 0.0, %v1199
        %v1201 = vpop.f32.mrb[0].mxu0
        %1202 = vmatprep.mubr.bf16.mxu0 0
        %1203 = vmatmul.mubr.bf16.gmra.mrb[0].mxu0 %v798
        %v1204 = vpop.f32.mrb[0].mxu0
        %v1205 = vadd.f32 0.0, %v1204
        %v1206 = vpop.f32.mrb[0].mxu0
        %v1207 = vpop.f32.mrb[0].mxu0
        %v1208 = vadd.f32 0.0, %v1207
        %v1209 = vpop.f32.mrb[0].mxu0
        %1210 = vmatprep.mubr.bf16.mxu0 0
        %1211 = vmatmul.mubr.bf16.gmra.mrb[0].mxu0 %v799
        %v1212 = vpop.f32.mrb[0].mxu0
        %v1213 = vadd.f32 0.0, %v1212
        %v1214 = vpop.f32.mrb[0].mxu0
        %v1215 = vpop.f32.mrb[0].mxu0
        %v1216 = vadd.f32 0.0, %v1215
        %v1217 = vpop.f32.mrb[0].mxu0
        %1218 = vmatprep.mubr.bf16.mxu0 0
        %1219 = vmatmul.mubr.bf16.gmra.mrb[0].mxu0 %v800
        %v1220 = vpop.f32.mrb[0].mxu0
        %v1221 = vadd.f32 0.0, %v1220
        %v1222 = vpop.f32.mrb[0].mxu0
        %v1223 = vpop.f32.mrb[0].mxu0
        %v1224 = vadd.f32 0.0, %v1223
        %v1225 = vpop.f32.mrb[0].mxu0
        %1226 = vmatprep.mubr.bf16.mxu0 0
        %1227 = vmatmul.mubr.bf16.gmra.mrb[0].mxu0 %v801
        %v1228 = vpop.f32.mrb[0].mxu0
        %v1229 = vadd.f32 0.0, %v1228
        %v1230 = vpop.f32.mrb[0].mxu0
        %v1231 = vpop.f32.mrb[0].mxu0
        %v1232 = vadd.f32 0.0, %v1231
        %v1233 = vpop.f32.mrb[0].mxu0
        %1234 = vmatprep.mubr.bf16.mxu0 0
        %1235 = vmatmul.mubr.bf16.gmra.mrb[0].mxu0 %v802
        %v1236 = vpop.f32.mrb[0].mxu0
        %v1237 = vadd.f32 0.0, %v1236
        %v1238 = vpop.f32.mrb[0].mxu0
        %v1239 = vpop.f32.mrb[0].mxu0
        %v1240 = vadd.f32 0.0, %v1239
        %v1241 = vpop.f32.mrb[0].mxu0
        %1242 = vmatprep.mubr.bf16.mxu0 0
        %1243 = vmatmul.mubr.bf16.gmra.mrb[0].mxu0 %v803
        %v1244 = vpop.f32.mrb[0].mxu0
        %v1245 = vadd.f32 0.0, %v1244
        %v1246 = vpop.f32.mrb[0].mxu0
        %v1247 = vpop.f32.mrb[0].mxu0
        %v1248 = vadd.f32 0.0, %v1247
        %v1249 = vpop.f32.mrb[0].mxu0
        %1250 = vmatprep.mubr.bf16.mxu0 0
        %1251 = vmatmul.mubr.bf16.gmra.mrb[0].mxu0 %v804
        %v1252 = vpop.f32.mrb[0].mxu0
        %v1253 = vadd.f32 0.0, %v1252
        %v1254 = vpop.f32.mrb[0].mxu0
        %v1255 = vpop.f32.mrb[0].mxu0
        %v1256 = vadd.f32 0.0, %v1255
        %v1257 = vpop.f32.mrb[0].mxu0
        %1258 = vmatprep.mubr.bf16.mxu0 0
        %1259 = vmatmul.mubr.bf16.gmra.mrb[0].mxu0 %v805
        %v1260 = vpop.f32.mrb[0].mxu0
        %v1261 = vadd.f32 0.0, %v1260
        %v1262 = vpop.f32.mrb[0].mxu0
        %v1263 = vpop.f32.mrb[0].mxu0
        %v1264 = vadd.f32 0.0, %v1263
        %v1265 = vpop.f32.mrb[0].mxu0
        %1266 = vmatprep.mubr.bf16.mxu0 0
        %1267 = vmatmul.mubr.bf16.gmra.mrb[0].mxu0 %v806
        %v1268 = vpop.f32.mrb[0].mxu0
        %v1269 = vadd.f32 0.0, %v1268
        %v1270 = vpop.f32.mrb[0].mxu0
        %v1271 = vpop.f32.mrb[0].mxu0
        %v1272 = vadd.f32 0.0, %v1271
        %v1273 = vpop.f32.mrb[0].mxu0
        %1274 = vmatprep.mubr.bf16.mxu0 0
        %1275 = vmatmul.mubr.bf16.gmra.mrb[0].mxu0 %v807
        %v1276 = vpop.f32.mrb[0].mxu0
        %v1277 = vadd.f32 0.0, %v1276
        %v1278 = vpop.f32.mrb[0].mxu0
        %v1279 = vpop.f32.mrb[0].mxu0
        %v1280 = vadd.f32 0.0, %v1279
        %v1281 = vpop.f32.mrb[0].mxu0
        %1282 = vmatprep.mubr.bf16.mxu0 0
        %1283 = vmatmul.mubr.bf16.gmra.mrb[0].mxu0 %v808
        %v1284 = vpop.f32.mrb[0].mxu0
        %v1285 = vadd.f32 0.0, %v1284
        %v1286 = vpop.f32.mrb[0].mxu0
        %v1287 = vpop.f32.mrb[0].mxu0
        %v1288 = vadd.f32 0.0, %v1287
        %v1289 = vpop.f32.mrb[0].mxu0
        %1290 = vmatprep.mubr.bf16.mxu0 0
        %1291 = vmatmul.mubr.bf16.gmra.mrb[0].mxu0 %v809
        %v1292 = vpop.f32.mrb[0].mxu0
        %v1293 = vadd.f32 0.0, %v1292
        %v1294 = vpop.f32.mrb[0].mxu0
        %v1295 = vpop.f32.mrb[0].mxu0
        %v1296 = vadd.f32 0.0, %v1295
        %v1297 = vpop.f32.mrb[0].mxu0
        %1298 = vmatprep.mubr.bf16.mxu0 0
        %1299 = vmatmul.mubr.bf16.gmra.mrb[0].mxu0 %v810
        %v1300 = vpop.f32.mrb[0].mxu0
        %v1301 = vadd.f32 0.0, %v1300
        %v1302 = vpop.f32.mrb[0].mxu0
        %v1303 = vpop.f32.mrb[0].mxu0
        %v1304 = vadd.f32 0.0, %v1303
        %v1305 = vpop.f32.mrb[0].mxu0
        %1306 = vmatprep.mubr.bf16.mxu0 0
        %1307 = vmatmul.mubr.bf16.gmra.mrb[0].mxu0 %v811
        %v1308 = vpop.f32.mrb[0].mxu0
        %v1309 = vadd.f32 0.0, %v1308
        %v1310 = vpop.f32.mrb[0].mxu0
        %v1311 = vpop.f32.mrb[0].mxu0
        %v1312 = vadd.f32 0.0, %v1311
        %v1313 = vpop.f32.mrb[0].mxu0
        %1314 = vmatprep.mubr.bf16.mxu0 0
        %1315 = vmatmul.mubr.bf16.gmra.mrb[0].mxu0 %v812
        %v1316 = vpop.f32.mrb[0].mxu0
        %v1317 = vadd.f32 0.0, %v1316
        %v1318 = vpop.f32.mrb[0].mxu0
        %v1319 = vpop.f32.mrb[0].mxu0
        %v1320 = vadd.f32 0.0, %v1319
        %v1321 = vpop.f32.mrb[0].mxu0
        %1322 = vmatprep.mubr.bf16.mxu0 0
        %1323 = vmatmul.mubr.bf16.gmra.mrb[0].mxu0 %v813
        %v1324 = vpop.f32.mrb[0].mxu0
        %v1325 = vadd.f32 0.0, %v1324
        %v1326 = vpop.f32.mrb[0].mxu0
        %v1327 = vpop.f32.mrb[0].mxu0
        %v1328 = vadd.f32 0.0, %v1327
        %v1329 = vpop.f32.mrb[0].mxu0
        %1330 = vmatprep.mubr.bf16.mxu0 0
        %1331 = vmatmul.mubr.bf16.gmra.mrb[0].mxu0 %v814
        %v1332 = vpop.f32.mrb[0].mxu0
        %v1333 = vadd.f32 0.0, %v1332
        %v1334 = vpop.f32.mrb[0].mxu0
        %v1335 = vpop.f32.mrb[0].mxu0
        %v1336 = vadd.f32 0.0, %v1335
        %v1337 = vpop.f32.mrb[0].mxu0
        %1338 = vmatprep.mubr.bf16.mxu0 0
        %1339 = vmatmul.mubr.bf16.gmra.mrb[0].mxu0 %v815
        %v1340 = vpop.f32.mrb[0].mxu0
        %v1341 = vadd.f32 0.0, %v1340
        %v1342 = vpop.f32.mrb[0].mxu0
        %v1343 = vpop.f32.mrb[0].mxu0
        %v1344 = vadd.f32 0.0, %v1343
        %v1345 = vpop.f32.mrb[0].mxu0
        %1346 = vmatprep.mubr.bf16.mxu0 0
        %1347 = vmatmul.mubr.bf16.gmra.mrb[0].mxu0 %v816
        %v1348 = vpop.f32.mrb[0].mxu0
        %v1349 = vadd.f32 0.0, %v1348
        %v1350 = vpop.f32.mrb[0].mxu0
        %v1351 = vpop.f32.mrb[0].mxu0
        %v1352 = vadd.f32 0.0, %v1351
        %v1353 = vpop.f32.mrb[0].mxu0
        %1354 = vmatprep.mubr.bf16.mxu0 0
        %1355 = vmatmul.mubr.bf16.gmra.mrb[0].mxu0 %v817
        %v1356 = vpop.f32.mrb[0].mxu0
        %v1357 = vadd.f32 0.0, %v1356
        %v1358 = vpop.f32.mrb[0].mxu0
        %v1359 = vpop.f32.mrb[0].mxu0
        %v1360 = vadd.f32 0.0, %v1359
        %v1361 = vpop.f32.mrb[0].mxu0
        %1362 = vmatprep.mubr.bf16.mxu0 0
        %1363 = vmatmul.mubr.bf16.gmra.mrb[0].mxu0 %v818
        %v1364 = vpop.f32.mrb[0].mxu0
        %v1365 = vadd.f32 0.0, %v1364
        %v1366 = vpop.f32.mrb[0].mxu0
        %v1367 = vpop.f32.mrb[0].mxu0
        %v1368 = vadd.f32 0.0, %v1367
        %v1369 = vpop.f32.mrb[0].mxu0
        %1370 = vmatprep.mubr.bf16.mxu0 0
        %1371 = vmatmul.mubr.bf16.gmra.mrb[0].mxu0 %v819
        %v1372 = vpop.f32.mrb[0].mxu0
        %v1373 = vadd.f32 0.0, %v1372
        %v1374 = vpop.f32.mrb[0].mxu0
        %v1375 = vpop.f32.mrb[0].mxu0
        %v1376 = vadd.f32 0.0, %v1375
        %v1377 = vpop.f32.mrb[0].mxu0
        %1378 = vmatprep.mubr.bf16.mxu0 0
        %1379 = vmatmul.mubr.bf16.gmra.mrb[0].mxu0 %v820
        %v1380 = vpop.f32.mrb[0].mxu0
        %v1381 = vadd.f32 0.0, %v1380
        %v1382 = vpop.f32.mrb[0].mxu0
        %v1383 = vpop.f32.mrb[0].mxu0
        %v1384 = vadd.f32 0.0, %v1383
        %v1385 = vpop.f32.mrb[0].mxu0
        %1386 = vmatprep.mubr.bf16.mxu0 0
        %1387 = vmatmul.mubr.bf16.gmra.mrb[0].mxu0 %v821
        %v1388 = vpop.f32.mrb[0].mxu0
        %v1389 = vadd.f32 0.0, %v1388
        %v1390 = vpop.f32.mrb[0].mxu0
        %v1391 = vpop.f32.mrb[0].mxu0
        %v1392 = vadd.f32 0.0, %v1391
        %v1393 = vpop.f32.mrb[0].mxu0
        %1394 = vmatprep.mubr.bf16.mxu0 0
        %1395 = vmatmul.mubr.bf16.gmra.mrb[0].mxu0 %v822
        %v1396 = vpop.f32.mrb[0].mxu0
        %v1397 = vadd.f32 0.0, %v1396
        %v1398 = vpop.f32.mrb[0].mxu0
        %v1399 = vpop.f32.mrb[0].mxu0
        %v1400 = vadd.f32 0.0, %v1399
        %v1401 = vpop.f32.mrb[0].mxu0
        %1402 = vmatprep.mubr.bf16.mxu0 0
        %1403 = vmatmul.mubr.bf16.gmra.mrb[0].mxu0 %v823
        %v1404 = vpop.f32.mrb[0].mxu0
        %v1405 = vadd.f32 0.0, %v1404
        %v1406 = vpop.f32.mrb[0].mxu0
        %v1407 = vpop.f32.mrb[0].mxu0
        %v1408 = vadd.f32 0.0, %v1407
        %v1409 = vpop.f32.mrb[0].mxu0
        %1410 = vmatprep.mubr.bf16.mxu0 0
        %1411 = vmatmul.mubr.bf16.gmra.mrb[0].mxu0 %v824
        %v1412 = vpop.f32.mrb[0].mxu0
        %v1413 = vadd.f32 0.0, %v1412
        %v1414 = vpop.f32.mrb[0].mxu0
        %v1415 = vpop.f32.mrb[0].mxu0
        %v1416 = vadd.f32 0.0, %v1415
        %v1417 = vpop.f32.mrb[0].mxu0
        %1418 = vmatprep.mubr.bf16.mxu0 0
        %1419 = vmatmul.mubr.bf16.gmra.mrb[0].mxu0 %v825
        %v1420 = vpop.f32.mrb[0].mxu0
        %v1421 = vadd.f32 0.0, %v1420
        %v1422 = vpop.f32.mrb[0].mxu0
        %v1423 = vpop.f32.mrb[0].mxu0
        %v1424 = vadd.f32 0.0, %v1423
        %v1425 = vpop.f32.mrb[0].mxu0
        %1426 = vmatprep.mubr.bf16.mxu0 0
        %1427 = vmatmul.mubr.bf16.gmra.mrb[0].mxu0 %v826
        %v1428 = vpop.f32.mrb[0].mxu0
        %v1429 = vadd.f32 0.0, %v1428
        %v1430 = vpop.f32.mrb[0].mxu0
        %v1431 = vpop.f32.mrb[0].mxu0
        %v1432 = vadd.f32 0.0, %v1431
        %v1433 = vpop.f32.mrb[0].mxu0
        %1434 = vmatprep.mubr.bf16.mxu0 0
        %1435 = vmatmul.mubr.bf16.gmra.mrb[0].mxu0 %v827
        %v1436 = vpop.f32.mrb[0].mxu0
        %v1437 = vadd.f32 0.0, %v1436
        %v1438 = vpop.f32.mrb[0].mxu0
        %v1439 = vpop.f32.mrb[0].mxu0
        %v1440 = vadd.f32 0.0, %v1439
        %v1441 = vpop.f32.mrb[0].mxu0
        %1442 = vmatprep.mubr.bf16.mxu0 0
        %1443 = vmatmul.mubr.bf16.gmra.mrb[0].mxu0 %v828
        %v1444 = vpop.f32.mrb[0].mxu0
        %v1445 = vadd.f32 0.0, %v1444
        %v1446 = vpop.f32.mrb[0].mxu0
        %v1447 = vpop.f32.mrb[0].mxu0
        %v1448 = vadd.f32 0.0, %v1447
        %v1449 = vpop.f32.mrb[0].mxu0
        %1450 = vmatprep.mubr.bf16.mxu0 0
        %1451 = vmatmul.mubr.bf16.gmra.mrb[0].mxu0 %v829
        %v1452 = vpop.f32.mrb[0].mxu0
        %v1453 = vadd.f32 0.0, %v1452
        %v1454 = vpop.f32.mrb[0].mxu0
        %v1455 = vpop.f32.mrb[0].mxu0
        %v1456 = vadd.f32 0.0, %v1455
        %v1457 = vpop.f32.mrb[0].mxu0
        %1458 = vmatprep.mubr.bf16.mxu0 0
        %1459 = vmatmul.mubr.bf16.gmra.mrb[0].mxu0 %v830
        %v1460 = vpop.f32.mrb[0].mxu0
        %v1461 = vadd.f32 0.0, %v1460
        %v1462 = vpop.f32.mrb[0].mxu0
        %v1463 = vpop.f32.mrb[0].mxu0
        %v1464 = vadd.f32 0.0, %v1463
        %v1465 = vpop.f32.mrb[0].mxu0
        %1466 = vmatprep.mubr.bf16.mxu0 0
        %1467 = vmatmul.mubr.bf16.gmra.mrb[0].mxu0 %v831
        %v1468 = vpop.f32.mrb[0].mxu0
        %v1469 = vadd.f32 0.0, %v1468
        %v1470 = vpop.f32.mrb[0].mxu0
        %v1471 = vpop.f32.mrb[0].mxu0
        %v1472 = vadd.f32 0.0, %v1471
        %v1473 = vpop.f32.mrb[0].mxu0
        %1474 = vmatprep.mubr.bf16.mxu0 0
        %1475 = vmatmul.mubr.bf16.gmra.mrb[0].mxu0 %v832
        %v1476 = vpop.f32.mrb[0].mxu0
        %v1477 = vadd.f32 0.0, %v1476
        %v1478 = vpop.f32.mrb[0].mxu0
        %v1479 = vpop.f32.mrb[0].mxu0
        %v1480 = vadd.f32 0.0, %v1479
        %v1481 = vpop.f32.mrb[0].mxu0
        %1482 = vmatprep.mubr.bf16.mxu0 0
        %1483 = vmatmul.mubr.bf16.gmra.mrb[0].mxu0 %v833
        %v1484 = vpop.f32.mrb[0].mxu0
        %v1485 = vadd.f32 0.0, %v1484
        %v1486 = vpop.f32.mrb[0].mxu0
        %v1487 = vpop.f32.mrb[0].mxu0
        %v1488 = vadd.f32 0.0, %v1487
        %v1489 = vpop.f32.mrb[0].mxu0
        %1490 = vdwg.mxu0
        %v1491 = vtanh.pop %v981
        %v1492 = vtanh.pop %v984
        %v1493 = vtanh.pop %v989
        %v1494 = vtanh.pop %v992
        %v1495 = vtanh.pop %v997
        %v1496 = vtanh.pop %v1000
        %v1497 = vtanh.pop %v1005
        %v1498 = vtanh.pop %v1008
        %v1499 = vtanh.pop %v1013
        %v1500 = vtanh.pop %v1016
        %v1501 = vtanh.pop %v1021
        %v1502 = vtanh.pop %v1024
        %v1503 = vtanh.pop %v1029
        %v1504 = vtanh.pop %v1032
        %v1505 = vtanh.pop %v1037
        %v1506 = vtanh.pop %v1040
        %v1507 = vtanh.pop %v1045
        %v1508 = vtanh.pop %v1048
        %v1509 = vtanh.pop %v1053
        %v1510 = vtanh.pop %v1056
        %v1511 = vtanh.pop %v1061
        %v1512 = vtanh.pop %v1064
        %v1513 = vtanh.pop %v1069
        %v1514 = vtanh.pop %v1072
        %v1515 = vtanh.pop %v1077
        %v1516 = vtanh.pop %v1080
        %v1517 = vtanh.pop %v1085
        %v1518 = vtanh.pop %v1088
        %v1519 = vtanh.pop %v1093
        %v1520 = vtanh.pop %v1096
        %v1521 = vtanh.pop %v1101
        %v1522 = vtanh.pop %v1104
        %v1523 = vtanh.pop %v1109
        %v1524 = vtanh.pop %v1112
        %v1525 = vtanh.pop %v1117
        %v1526 = vtanh.pop %v1120
        %v1527 = vtanh.pop %v1125
        %v1528 = vtanh.pop %v1128
        %v1529 = vtanh.pop %v1133
        %v1530 = vtanh.pop %v1136
        %v1531 = vtanh.pop %v1141
        %v1532 = vtanh.pop %v1144
        %v1533 = vtanh.pop %v1149
        %v1534 = vtanh.pop %v1152
        %v1535 = vtanh.pop %v1157
        %v1536 = vtanh.pop %v1160
        %v1537 = vtanh.pop %v1165
        %v1538 = vtanh.pop %v1168
        %v1539 = vtanh.pop %v1173
        %v1540 = vtanh.pop %v1176
        %v1541 = vtanh.pop %v1181
        %v1542 = vtanh.pop %v1184
        %v1543 = vtanh.pop %v1189
        %v1544 = vtanh.pop %v1192
        %v1545 = vtanh.pop %v1197
        %v1546 = vtanh.pop %v1200
        %v1547 = vtanh.pop %v1205
        %v1548 = vtanh.pop %v1208
        %v1549 = vtanh.pop %v1213
        %v1550 = vtanh.pop %v1216
        %v1551 = vtanh.pop %v1221
        %v1552 = vtanh.pop %v1224
        %v1553 = vtanh.pop %v1229
        %v1554 = vtanh.pop %v1232
        %v1555 = vtanh.pop %v1237
        %v1556 = vtanh.pop %v1240
        %v1557 = vtanh.pop %v1245
        %v1558 = vtanh.pop %v1248
        %v1559 = vtanh.pop %v1253
        %v1560 = vtanh.pop %v1256
        %v1561 = vtanh.pop %v1261
        %v1562 = vtanh.pop %v1264
        %v1563 = vtanh.pop %v1269
        %v1564 = vtanh.pop %v1272
        %v1565 = vtanh.pop %v1277
        %v1566 = vtanh.pop %v1280
        %v1567 = vtanh.pop %v1285
        %v1568 = vtanh.pop %v1288
        %v1569 = vtanh.pop %v1293
        %v1570 = vtanh.pop %v1296
        %v1571 = vtanh.pop %v1301
        %v1572 = vtanh.pop %v1304
        %v1573 = vtanh.pop %v1309
        %v1574 = vtanh.pop %v1312
        %v1575 = vtanh.pop %v1317
        %v1576 = vtanh.pop %v1320
        %v1577 = vtanh.pop %v1325
        %v1578 = vtanh.pop %v1328
        %v1579 = vtanh.pop %v1333
        %v1580 = vtanh.pop %v1336
        %v1581 = vtanh.pop %v1341
        %v1582 = vtanh.pop %v1344
        %v1583 = vtanh.pop %v1349
        %v1584 = vtanh.pop %v1352
        %v1585 = vtanh.pop %v1357
        %v1586 = vtanh.pop %v1360
        %v1587 = vtanh.pop %v1365
        %v1588 = vtanh.pop %v1368
        %v1589 = vtanh.pop %v1373
        %v1590 = vtanh.pop %v1376
        %v1591 = vtanh.pop %v1381
        %v1592 = vtanh.pop %v1384
        %v1593 = vtanh.pop %v1389
        %v1594 = vtanh.pop %v1392
        %v1595 = vtanh.pop %v1397
        %v1596 = vtanh.pop %v1400
        %v1597 = vtanh.pop %v1405
        %v1598 = vtanh.pop %v1408
        %v1599 = vtanh.pop %v1413
        %v1600 = vtanh.pop %v1416
        %v1601 = vtanh.pop %v1421
        %v1602 = vtanh.pop %v1424
        %v1603 = vtanh.pop %v1429
        %v1604 = vtanh.pop %v1432
        %v1605 = vtanh.pop %v1437
        %v1606 = vtanh.pop %v1440
        %v1607 = vtanh.pop %v1445
        %v1608 = vtanh.pop %v1448
        %v1609 = vtanh.pop %v1453
        %v1610 = vtanh.pop %v1456
        %v1611 = vtanh.pop %v1461
        %v1612 = vtanh.pop %v1464
        %v1613 = vtanh.pop %v1469
        %v1614 = vtanh.pop %v1472
        %v1615 = vtanh.pop %v1477
        %v1616 = vtanh.pop %v1480
        %v1617 = vtanh.pop %v1485
        %v1618 = vtanh.pop %v1488
        %v1619 = vpack.c.bf16 %v1492, %v1491
        %v1620 = vpack.c.bf16 %v1494, %v1493
        %v1621 = vpack.c.bf16 %v1496, %v1495
        %v1622 = vpack.c.bf16 %v1498, %v1497
        %v1623 = vpack.c.bf16 %v1500, %v1499
        %v1624 = vpack.c.bf16 %v1502, %v1501
        %v1625 = vpack.c.bf16 %v1504, %v1503
        %v1626 = vpack.c.bf16 %v1506, %v1505
        %v1627 = vpack.c.bf16 %v1508, %v1507
        %v1628 = vpack.c.bf16 %v1510, %v1509
        %v1629 = vpack.c.bf16 %v1512, %v1511
        %v1630 = vpack.c.bf16 %v1514, %v1513
        %v1631 = vpack.c.bf16 %v1516, %v1515
        %v1632 = vpack.c.bf16 %v1518, %v1517
        %v1633 = vpack.c.bf16 %v1520, %v1519
        %v1634 = vpack.c.bf16 %v1522, %v1521
        %v1635 = vpack.c.bf16 %v1524, %v1523
        %v1636 = vpack.c.bf16 %v1526, %v1525
        %v1637 = vpack.c.bf16 %v1528, %v1527
        %v1638 = vpack.c.bf16 %v1530, %v1529
        %v1639 = vpack.c.bf16 %v1532, %v1531
        %v1640 = vpack.c.bf16 %v1534, %v1533
        %v1641 = vpack.c.bf16 %v1536, %v1535
        %v1642 = vpack.c.bf16 %v1538, %v1537
        %v1643 = vpack.c.bf16 %v1540, %v1539
        %v1644 = vpack.c.bf16 %v1542, %v1541
        %v1645 = vpack.c.bf16 %v1544, %v1543
        %v1646 = vpack.c.bf16 %v1546, %v1545
        %v1647 = vpack.c.bf16 %v1548, %v1547
        %v1648 = vpack.c.bf16 %v1550, %v1549
        %v1649 = vpack.c.bf16 %v1552, %v1551
        %v1650 = vpack.c.bf16 %v1554, %v1553
        %v1651 = vpack.c.bf16 %v1556, %v1555
        %v1652 = vpack.c.bf16 %v1558, %v1557
        %v1653 = vpack.c.bf16 %v1560, %v1559
        %v1654 = vpack.c.bf16 %v1562, %v1561
        %v1655 = vpack.c.bf16 %v1564, %v1563
        %v1656 = vpack.c.bf16 %v1566, %v1565
        %v1657 = vpack.c.bf16 %v1568, %v1567
        %v1658 = vpack.c.bf16 %v1570, %v1569
        %v1659 = vpack.c.bf16 %v1572, %v1571
        %v1660 = vpack.c.bf16 %v1574, %v1573
        %v1661 = vpack.c.bf16 %v1576, %v1575
        %v1662 = vpack.c.bf16 %v1578, %v1577
        %v1663 = vpack.c.bf16 %v1580, %v1579
        %v1664 = vpack.c.bf16 %v1582, %v1581
        %v1665 = vpack.c.bf16 %v1584, %v1583
        %v1666 = vpack.c.bf16 %v1586, %v1585
        %v1667 = vpack.c.bf16 %v1588, %v1587
        %v1668 = vpack.c.bf16 %v1590, %v1589
        %v1669 = vpack.c.bf16 %v1592, %v1591
        %v1670 = vpack.c.bf16 %v1594, %v1593
        %v1671 = vpack.c.bf16 %v1596, %v1595
        %v1672 = vpack.c.bf16 %v1598, %v1597
        %v1673 = vpack.c.bf16 %v1600, %v1599
        %v1674 = vpack.c.bf16 %v1602, %v1601
        %v1675 = vpack.c.bf16 %v1604, %v1603
        %v1676 = vpack.c.bf16 %v1606, %v1605
        %v1677 = vpack.c.bf16 %v1608, %v1607
        %v1678 = vpack.c.bf16 %v1610, %v1609
        %v1679 = vpack.c.bf16 %v1612, %v1611
        %v1680 = vpack.c.bf16 %v1614, %v1613
        %v1681 = vpack.c.bf16 %v1616, %v1615
        %v1682 = vpack.c.bf16 %v1618, %v1617
        %v1683 = vld [vmem:[%s326] sm:$0xf]
        %v1684 = vld [vmem:[%s326 + $0x4] sm:$0xf]
        %v1687 = vunpack.c.l.b16 %v1683
        %v1688 = vunpack.c.l.b16 %v1684
        %v1689 = vpack.c.b16 %v1688, %v1687
        %1691 = vmatprep.subr.bf16.mxu0 0
        %1692 = vmatpush1.bf16.xpose.msra.mxu0 %v930
        %1693 = vmatprep.subr.bf16.mxu0 0
        %1694 = vmatpush1.bf16.xpose.msra.mxu0 %v931
        %1695 = vmatprep.subr.bf16.mxu0 0
        %1696 = vmatpush1.bf16.xpose.msra.mxu0 %v932
        %1697 = vmatprep.subr.bf16.mxu0 0
        %1698 = vmatpush1.bf16.xpose.msra.mxu0 %v933
        %1699 = vmatprep.subr.bf16.mxu0 0
        %1700 = vmatpush1.bf16.xpose.msra.mxu0 %v934
        %1701 = vmatprep.subr.bf16.mxu0 0
        %1702 = vmatpush1.bf16.xpose.msra.mxu0 %v935
        %1703 = vmatprep.subr.bf16.mxu0 0
        %1704 = vmatpush1.bf16.xpose.msra.mxu0 %v936
        %1705 = vmatprep.subr.bf16.mxu0 0
        %1706 = vmatpush1.bf16.xpose.msra.mxu0 %v937
        %1707 = vmatprep.subr.bf16.mxu0 0
        %1708 = vmatpush1.bf16.xpose.msra.mxu0 0
        %1709 = vmatprep.subr.bf16.mxu0 0
        %1710 = vmatpush1.bf16.xpose.msra.mxu0 0
        %1711 = vmatprep.subr.bf16.mxu0 0
        %1712 = vmatpush1.bf16.xpose.msra.mxu0 0
        %1713 = vmatprep.subr.bf16.mxu0 0
        %1714 = vmatpush1.bf16.xpose.msra.mxu0 0
        %1715 = vmatprep.subr.bf16.mxu0 0
        %1716 = vmatpush1.bf16.xpose.msra.mxu0 0
        %1717 = vmatprep.subr.bf16.mxu0 0
        %1718 = vmatpush1.bf16.xpose.msra.mxu0 0
        %1719 = vmatprep.subr.bf16.mxu0 0
        %1720 = vmatpush1.bf16.xpose.msra.mxu0 0
        %1721 = vmatprep.subr.bf16.mxu0 0
        %1722 = vmatpush1.bf16.xpose.msra.mxu0 0
        %1723 = vmatprep.mubr.bf16.mxu0 0
        %1724 = vmatmul.mubr.bf16.gmra.mrb[0].mxu0 %v1689
        %v1725 = vpop.f32.mrb[0].mxu0
        %v1726 = vadd.f32 0.0, %v1725
        %v1727 = vpop.f32.mrb[0].mxu0
        %v1728 = vpop.f32.mrb[0].mxu0
        %v1729 = vadd.f32 0.0, %v1728
        %v1730 = vpop.f32.mrb[0].mxu0
        %1731 = vdwg.mxu0
        %v1732 = vld [vmem:[#allocation2] sm:$0xff]
        %s1733 = smul.u32 %s27, 16
        %v1734 = vlaneseq
        %v1735 = vshrl.u32 %v1734, 7
        %v1736 = vsub.s32 0, %v1735
        %v1737 = vrot.slane %v1726, %v1736
        %vm1738 = vcmask 523264
        %v1740 = vsel %vm1738, %v369, 0
        %1742 = vmatprep.subr.bf16.mxu0 0
        %1743 = vmatpush1.bf16.msra.mxu0 %v1619
        %1744 = vmatprep.subr.bf16.mxu0 0
        %1745 = vmatpush1.bf16.msra.mxu0 %v1620
        %1746 = vmatprep.subr.bf16.mxu0 0
        %1747 = vmatpush1.bf16.msra.mxu0 %v1621
        %1748 = vmatprep.subr.bf16.mxu0 0
        %1749 = vmatpush1.bf16.msra.mxu0 %v1622
        %1750 = vmatprep.subr.bf16.mxu0 0
        %1751 = vmatpush1.bf16.msra.mxu0 0
        %1752 = vmatprep.subr.bf16.mxu0 0
        %1753 = vmatpush1.bf16.msra.mxu0 0
        %1754 = vmatprep.subr.bf16.mxu0 0
        %1755 = vmatpush1.bf16.msra.mxu0 0
        %1756 = vmatprep.subr.bf16.mxu0 0
        %1757 = vmatpush1.bf16.msra.mxu0 0
        %1758 = vmatprep.subr.bf16.mxu0 0
        %1759 = vmatpush1.bf16.msra.mxu0 0
        %1760 = vmatprep.subr.bf16.mxu0 0
        %1761 = vmatpush1.bf16.msra.mxu0 0
        %1762 = vmatprep.subr.bf16.mxu0 0
        %1763 = vmatpush1.bf16.msra.mxu0 0
        %1764 = vmatprep.subr.bf16.mxu0 0
        %1765 = vmatpush1.bf16.msra.mxu0 0
        %1766 = vmatprep.subr.bf16.mxu0 0
        %1767 = vmatpush1.bf16.msra.mxu0 0
        %1768 = vmatprep.subr.bf16.mxu0 0
        %1769 = vmatpush1.bf16.msra.mxu0 0
        %1770 = vmatprep.subr.bf16.mxu0 0
        %1771 = vmatpush1.bf16.msra.mxu0 0
        %1772 = vmatprep.subr.bf16.mxu0 0
        %1773 = vmatpush1.bf16.msra.mxu0 0
        %1774 = vmatprep.mubr.bf16.mxu0 0
        %1775 = vmatmul.mubr.bf16.gmra.mrb[0].mxu0 %v1740
        %v1776 = vpop.f32.mrb[0].mxu0
        %v1777 = vadd.f32 %v1737, %v1776
        %v1778 = vpop.f32.mrb[0].mxu0
        %v1779 = vpop.f32.mrb[0].mxu0
        %v1780 = vpop.f32.mrb[0].mxu0
        %1781 = vdwg.mxu0
        %v1782 = vmax.f32 %v1777, 0.0
        %s1783 = sld [smem:[#allocation12 + %s1733]]
        %v1784 = vstv %s1783
        %v1785 = vmul.f32 %v1784, %v1782
        %v1786 = vadd.f32 %v1732, %v1785
        %v1787 = vlaneseq
        %v1788 = vshrl.u32 %v1787, 7
        %v1789 = vsub.s32 1, %v1788
        %v1790 = vrot.slane %v1726, %v1789
        %1791 = vmatprep.subr.bf16.mxu0 0
        %1792 = vmatpush1.bf16.msra.mxu0 %v1623
        %1793 = vmatprep.subr.bf16.mxu0 0
        %1794 = vmatpush1.bf16.msra.mxu0 %v1624
        %1795 = vmatprep.subr.bf16.mxu0 0
        %1796 = vmatpush1.bf16.msra.mxu0 %v1625
        %1797 = vmatprep.subr.bf16.mxu0 0
        %1798 = vmatpush1.bf16.msra.mxu0 %v1626
        %1799 = vmatprep.subr.bf16.mxu0 0
        %1800 = vmatpush1.bf16.msra.mxu0 0
        %1801 = vmatprep.subr.bf16.mxu0 0
        %1802 = vmatpush1.bf16.msra.mxu0 0
        %1803 = vmatprep.subr.bf16.mxu0 0
        %1804 = vmatpush1.bf16.msra.mxu0 0
        %1805 = vmatprep.subr.bf16.mxu0 0
        %1806 = vmatpush1.bf16.msra.mxu0 0
        %1807 = vmatprep.subr.bf16.mxu0 0
        %1808 = vmatpush1.bf16.msra.mxu0 0
        %1809 = vmatprep.subr.bf16.mxu0 0
        %1810 = vmatpush1.bf16.msra.mxu0 0
        %1811 = vmatprep.subr.bf16.mxu0 0
        %1812 = vmatpush1.bf16.msra.mxu0 0
        %1813 = vmatprep.subr.bf16.mxu0 0
        %1814 = vmatpush1.bf16.msra.mxu0 0
        %1815 = vmatprep.subr.bf16.mxu0 0
        %1816 = vmatpush1.bf16.msra.mxu0 0
        %1817 = vmatprep.subr.bf16.mxu0 0
        %1818 = vmatpush1.bf16.msra.mxu0 0
        %1819 = vmatprep.subr.bf16.mxu0 0
        %1820 = vmatpush1.bf16.msra.mxu0 0
        %1821 = vmatprep.subr.bf16.mxu0 0
        %1822 = vmatpush1.bf16.msra.mxu0 0
        %1823 = vmatprep.mubr.bf16.mxu0 0
        %1824 = vmatmul.mubr.bf16.gmra.mrb[0].mxu0 %v1740
        %v1825 = vpop.f32.mrb[0].mxu0
        %v1826 = vadd.f32 %v1790, %v1825
        %v1827 = vpop.f32.mrb[0].mxu0
        %v1828 = vpop.f32.mrb[0].mxu0
        %v1829 = vpop.f32.mrb[0].mxu0
        %1830 = vdwg.mxu0
        %v1831 = vmax.f32 %v1826, 0.0
        %s1832 = sadd.s32 %s1733, 1
        %s1833 = sld [smem:[#allocation12 + %s1832]]
        %v1834 = vstv %s1833
        %v1835 = vmul.f32 %v1834, %v1831
        %v1836 = vadd.f32 %v1786, %v1835
        %v1837 = vlaneseq
        %v1838 = vshrl.u32 %v1837, 7
        %v1839 = vsub.s32 2, %v1838
        %v1840 = vrot.slane %v1726, %v1839
        %1841 = vmatprep.subr.bf16.mxu0 0
        %1842 = vmatpush1.bf16.msra.mxu0 %v1627
        %1843 = vmatprep.subr.bf16.mxu0 0
        %1844 = vmatpush1.bf16.msra.mxu0 %v1628
        %1845 = vmatprep.subr.bf16.mxu0 0
        %1846 = vmatpush1.bf16.msra.mxu0 %v1629
        %1847 = vmatprep.subr.bf16.mxu0 0
        %1848 = vmatpush1.bf16.msra.mxu0 %v1630
        %1849 = vmatprep.subr.bf16.mxu0 0
        %1850 = vmatpush1.bf16.msra.mxu0 0
        %1851 = vmatprep.subr.bf16.mxu0 0
        %1852 = vmatpush1.bf16.msra.mxu0 0
        %1853 = vmatprep.subr.bf16.mxu0 0
        %1854 = vmatpush1.bf16.msra.mxu0 0
        %1855 = vmatprep.subr.bf16.mxu0 0
        %1856 = vmatpush1.bf16.msra.mxu0 0
        %1857 = vmatprep.subr.bf16.mxu0 0
        %1858 = vmatpush1.bf16.msra.mxu0 0
        %1859 = vmatprep.subr.bf16.mxu0 0
        %1860 = vmatpush1.bf16.msra.mxu0 0
        %1861 = vmatprep.subr.bf16.mxu0 0
        %1862 = vmatpush1.bf16.msra.mxu0 0
        %1863 = vmatprep.subr.bf16.mxu0 0
        %1864 = vmatpush1.bf16.msra.mxu0 0
        %1865 = vmatprep.subr.bf16.mxu0 0
        %1866 = vmatpush1.bf16.msra.mxu0 0
        %1867 = vmatprep.subr.bf16.mxu0 0
        %1868 = vmatpush1.bf16.msra.mxu0 0
        %1869 = vmatprep.subr.bf16.mxu0 0
        %1870 = vmatpush1.bf16.msra.mxu0 0
        %1871 = vmatprep.subr.bf16.mxu0 0
        %1872 = vmatpush1.bf16.msra.mxu0 0
        %1873 = vmatprep.mubr.bf16.mxu0 0
        %1874 = vmatmul.mubr.bf16.gmra.mrb[0].mxu0 %v1740
        %v1875 = vpop.f32.mrb[0].mxu0
        %v1876 = vadd.f32 %v1840, %v1875
        %v1877 = vpop.f32.mrb[0].mxu0
        %v1878 = vpop.f32.mrb[0].mxu0
        %v1879 = vpop.f32.mrb[0].mxu0
        %1880 = vdwg.mxu0
        %v1881 = vmax.f32 %v1876, 0.0
        %s1882 = sadd.s32 %s1733, 2
        %s1883 = sld [smem:[#allocation12 + %s1882]]
        %v1884 = vstv %s1883
        %v1885 = vmul.f32 %v1884, %v1881
        %v1886 = vadd.f32 %v1836, %v1885
        %v1887 = vlaneseq
        %v1888 = vshrl.u32 %v1887, 7
        %v1889 = vsub.s32 3, %v1888
        %v1890 = vrot.slane %v1726, %v1889
        %1891 = vmatprep.subr.bf16.mxu0 0
        %1892 = vmatpush1.bf16.msra.mxu0 %v1631
        %1893 = vmatprep.subr.bf16.mxu0 0
        %1894 = vmatpush1.bf16.msra.mxu0 %v1632
        %1895 = vmatprep.subr.bf16.mxu0 0
        %1896 = vmatpush1.bf16.msra.mxu0 %v1633
        %1897 = vmatprep.subr.bf16.mxu0 0
        %1898 = vmatpush1.bf16.msra.mxu0 %v1634
        %1899 = vmatprep.subr.bf16.mxu0 0
        %1900 = vmatpush1.bf16.msra.mxu0 0
        %1901 = vmatprep.subr.bf16.mxu0 0
        %1902 = vmatpush1.bf16.msra.mxu0 0
        %1903 = vmatprep.subr.bf16.mxu0 0
        %1904 = vmatpush1.bf16.msra.mxu0 0
        %1905 = vmatprep.subr.bf16.mxu0 0
        %1906 = vmatpush1.bf16.msra.mxu0 0
        %1907 = vmatprep.subr.bf16.mxu0 0
        %1908 = vmatpush1.bf16.msra.mxu0 0
        %1909 = vmatprep.subr.bf16.mxu0 0
        %1910 = vmatpush1.bf16.msra.mxu0 0
        %1911 = vmatprep.subr.bf16.mxu0 0
        %1912 = vmatpush1.bf16.msra.mxu0 0
        %1913 = vmatprep.subr.bf16.mxu0 0
        %1914 = vmatpush1.bf16.msra.mxu0 0
        %1915 = vmatprep.subr.bf16.mxu0 0
        %1916 = vmatpush1.bf16.msra.mxu0 0
        %1917 = vmatprep.subr.bf16.mxu0 0
        %1918 = vmatpush1.bf16.msra.mxu0 0
        %1919 = vmatprep.subr.bf16.mxu0 0
        %1920 = vmatpush1.bf16.msra.mxu0 0
        %1921 = vmatprep.subr.bf16.mxu0 0
        %1922 = vmatpush1.bf16.msra.mxu0 0
        %1923 = vmatprep.mubr.bf16.mxu0 0
        %1924 = vmatmul.mubr.bf16.gmra.mrb[0].mxu0 %v1740
        %v1925 = vpop.f32.mrb[0].mxu0
        %v1926 = vadd.f32 %v1890, %v1925
        %v1927 = vpop.f32.mrb[0].mxu0
        %v1928 = vpop.f32.mrb[0].mxu0
        %v1929 = vpop.f32.mrb[0].mxu0
        %1930 = vdwg.mxu0
        %v1931 = vmax.f32 %v1926, 0.0
        %s1932 = sadd.s32 %s1733, 3
        %s1933 = sld [smem:[#allocation12 + %s1932]]
        %v1934 = vstv %s1933
        %v1935 = vmul.f32 %v1934, %v1931
        %v1936 = vadd.f32 %v1886, %v1935
        %v1937 = vlaneseq
        %v1938 = vshrl.u32 %v1937, 7
        %v1939 = vsub.s32 4, %v1938
        %v1940 = vrot.slane %v1726, %v1939
        %1941 = vmatprep.subr.bf16.mxu0 0
        %1942 = vmatpush1.bf16.msra.mxu0 %v1635
        %1943 = vmatprep.subr.bf16.mxu0 0
        %1944 = vmatpush1.bf16.msra.mxu0 %v1636
        %1945 = vmatprep.subr.bf16.mxu0 0
        %1946 = vmatpush1.bf16.msra.mxu0 %v1637
        %1947 = vmatprep.subr.bf16.mxu0 0
        %1948 = vmatpush1.bf16.msra.mxu0 %v1638
        %1949 = vmatprep.subr.bf16.mxu0 0
        %1950 = vmatpush1.bf16.msra.mxu0 0
        %1951 = vmatprep.subr.bf16.mxu0 0
        %1952 = vmatpush1.bf16.msra.mxu0 0
        %1953 = vmatprep.subr.bf16.mxu0 0
        %1954 = vmatpush1.bf16.msra.mxu0 0
        %1955 = vmatprep.subr.bf16.mxu0 0
        %1956 = vmatpush1.bf16.msra.mxu0 0
        %1957 = vmatprep.subr.bf16.mxu0 0
        %1958 = vmatpush1.bf16.msra.mxu0 0
        %1959 = vmatprep.subr.bf16.mxu0 0
        %1960 = vmatpush1.bf16.msra.mxu0 0
        %1961 = vmatprep.subr.bf16.mxu0 0
        %1962 = vmatpush1.bf16.msra.mxu0 0
        %1963 = vmatprep.subr.bf16.mxu0 0
        %1964 = vmatpush1.bf16.msra.mxu0 0
        %1965 = vmatprep.subr.bf16.mxu0 0
        %1966 = vmatpush1.bf16.msra.mxu0 0
        %1967 = vmatprep.subr.bf16.mxu0 0
        %1968 = vmatpush1.bf16.msra.mxu0 0
        %1969 = vmatprep.subr.bf16.mxu0 0
        %1970 = vmatpush1.bf16.msra.mxu0 0
        %1971 = vmatprep.subr.bf16.mxu0 0
        %1972 = vmatpush1.bf16.msra.mxu0 0
        %1973 = vmatprep.mubr.bf16.mxu0 0
        %1974 = vmatmul.mubr.bf16.gmra.mrb[0].mxu0 %v1740
        %v1975 = vpop.f32.mrb[0].mxu0
        %v1976 = vadd.f32 %v1940, %v1975
        %v1977 = vpop.f32.mrb[0].mxu0
        %v1978 = vpop.f32.mrb[0].mxu0
        %v1979 = vpop.f32.mrb[0].mxu0
        %1980 = vdwg.mxu0
        %v1981 = vmax.f32 %v1976, 0.0
        %s1982 = sadd.s32 %s1733, 4
        %s1983 = sld [smem:[#allocation12 + %s1982]]
        %v1984 = vstv %s1983
        %v1985 = vmul.f32 %v1984, %v1981
        %v1986 = vadd.f32 %v1936, %v1985
        %v1987 = vlaneseq
        %v1988 = vshrl.u32 %v1987, 7
        %v1989 = vsub.s32 5, %v1988
        %v1990 = vrot.slane %v1726, %v1989
        %1991 = vmatprep.subr.bf16.mxu0 0
        %1992 = vmatpush1.bf16.msra.mxu0 %v1639
        %1993 = vmatprep.subr.bf16.mxu0 0
        %1994 = vmatpush1.bf16.msra.mxu0 %v1640
        %1995 = vmatprep.subr.bf16.mxu0 0
        %1996 = vmatpush1.bf16.msra.mxu0 %v1641
        %1997 = vmatprep.subr.bf16.mxu0 0
        %1998 = vmatpush1.bf16.msra.mxu0 %v1642
        %1999 = vmatprep.subr.bf16.mxu0 0
        %2000 = vmatpush1.bf16.msra.mxu0 0
        %2001 = vmatprep.subr.bf16.mxu0 0
        %2002 = vmatpush1.bf16.msra.mxu0 0
        %2003 = vmatprep.subr.bf16.mxu0 0
        %2004 = vmatpush1.bf16.msra.mxu0 0
        %2005 = vmatprep.subr.bf16.mxu0 0
        %2006 = vmatpush1.bf16.msra.mxu0 0
        %2007 = vmatprep.subr.bf16.mxu0 0
        %2008 = vmatpush1.bf16.msra.mxu0 0
        %2009 = vmatprep.subr.bf16.mxu0 0
        %2010 = vmatpush1.bf16.msra.mxu0 0
        %2011 = vmatprep.subr.bf16.mxu0 0
        %2012 = vmatpush1.bf16.msra.mxu0 0
        %2013 = vmatprep.subr.bf16.mxu0 0
        %2014 = vmatpush1.bf16.msra.mxu0 0
        %2015 = vmatprep.subr.bf16.mxu0 0
        %2016 = vmatpush1.bf16.msra.mxu0 0
        %2017 = vmatprep.subr.bf16.mxu0 0
        %2018 = vmatpush1.bf16.msra.mxu0 0
        %2019 = vmatprep.subr.bf16.mxu0 0
        %2020 = vmatpush1.bf16.msra.mxu0 0
        %2021 = vmatprep.subr.bf16.mxu0 0
        %2022 = vmatpush1.bf16.msra.mxu0 0
        %2023 = vmatprep.mubr.bf16.mxu0 0
        %2024 = vmatmul.mubr.bf16.gmra.mrb[0].mxu0 %v1740
        %v2025 = vpop.f32.mrb[0].mxu0
        %v2026 = vadd.f32 %v1990, %v2025
        %v2027 = vpop.f32.mrb[0].mxu0
        %v2028 = vpop.f32.mrb[0].mxu0
        %v2029 = vpop.f32.mrb[0].mxu0
        %2030 = vdwg.mxu0
        %v2031 = vmax.f32 %v2026, 0.0
        %s2032 = sadd.s32 %s1733, 5
        %s2033 = sld [smem:[#allocation12 + %s2032]]
        %v2034 = vstv %s2033
        %v2035 = vmul.f32 %v2034, %v2031
        %v2036 = vadd.f32 %v1986, %v2035
        %v2037 = vlaneseq
        %v2038 = vshrl.u32 %v2037, 7
        %v2039 = vsub.s32 6, %v2038
        %v2040 = vrot.slane %v1726, %v2039
        %2041 = vmatprep.subr.bf16.mxu0 0
        %2042 = vmatpush1.bf16.msra.mxu0 %v1643
        %2043 = vmatprep.subr.bf16.mxu0 0
        %2044 = vmatpush1.bf16.msra.mxu0 %v1644
        %2045 = vmatprep.subr.bf16.mxu0 0
        %2046 = vmatpush1.bf16.msra.mxu0 %v1645
        %2047 = vmatprep.subr.bf16.mxu0 0
        %2048 = vmatpush1.bf16.msra.mxu0 %v1646
        %2049 = vmatprep.subr.bf16.mxu0 0
        %2050 = vmatpush1.bf16.msra.mxu0 0
        %2051 = vmatprep.subr.bf16.mxu0 0
        %2052 = vmatpush1.bf16.msra.mxu0 0
        %2053 = vmatprep.subr.bf16.mxu0 0
        %2054 = vmatpush1.bf16.msra.mxu0 0
        %2055 = vmatprep.subr.bf16.mxu0 0
        %2056 = vmatpush1.bf16.msra.mxu0 0
        %2057 = vmatprep.subr.bf16.mxu0 0
        %2058 = vmatpush1.bf16.msra.mxu0 0
        %2059 = vmatprep.subr.bf16.mxu0 0
        %2060 = vmatpush1.bf16.msra.mxu0 0
        %2061 = vmatprep.subr.bf16.mxu0 0
        %2062 = vmatpush1.bf16.msra.mxu0 0
        %2063 = vmatprep.subr.bf16.mxu0 0
        %2064 = vmatpush1.bf16.msra.mxu0 0
        %2065 = vmatprep.subr.bf16.mxu0 0
        %2066 = vmatpush1.bf16.msra.mxu0 0
        %2067 = vmatprep.subr.bf16.mxu0 0
        %2068 = vmatpush1.bf16.msra.mxu0 0
        %2069 = vmatprep.subr.bf16.mxu0 0
        %2070 = vmatpush1.bf16.msra.mxu0 0
        %2071 = vmatprep.subr.bf16.mxu0 0
        %2072 = vmatpush1.bf16.msra.mxu0 0
        %2073 = vmatprep.mubr.bf16.mxu0 0
        %2074 = vmatmul.mubr.bf16.gmra.mrb[0].mxu0 %v1740
        %v2075 = vpop.f32.mrb[0].mxu0
        %v2076 = vadd.f32 %v2040, %v2075
        %v2077 = vpop.f32.mrb[0].mxu0
        %v2078 = vpop.f32.mrb[0].mxu0
        %v2079 = vpop.f32.mrb[0].mxu0
        %2080 = vdwg.mxu0
        %v2081 = vmax.f32 %v2076, 0.0
        %s2082 = sadd.s32 %s1733, 6
        %s2083 = sld [smem:[#allocation12 + %s2082]]
        %v2084 = vstv %s2083
        %v2085 = vmul.f32 %v2084, %v2081
        %v2086 = vadd.f32 %v2036, %v2085
        %v2087 = vlaneseq
        %v2088 = vshrl.u32 %v2087, 7
        %v2089 = vsub.s32 7, %v2088
        %v2090 = vrot.slane %v1726, %v2089
        %2091 = vmatprep.subr.bf16.mxu0 0
        %2092 = vmatpush1.bf16.msra.mxu0 %v1647
        %2093 = vmatprep.subr.bf16.mxu0 0
        %2094 = vmatpush1.bf16.msra.mxu0 %v1648
        %2095 = vmatprep.subr.bf16.mxu0 0
        %2096 = vmatpush1.bf16.msra.mxu0 %v1649
        %2097 = vmatprep.subr.bf16.mxu0 0
        %2098 = vmatpush1.bf16.msra.mxu0 %v1650
        %2099 = vmatprep.subr.bf16.mxu0 0
        %2100 = vmatpush1.bf16.msra.mxu0 0
        %2101 = vmatprep.subr.bf16.mxu0 0
        %2102 = vmatpush1.bf16.msra.mxu0 0
        %2103 = vmatprep.subr.bf16.mxu0 0
        %2104 = vmatpush1.bf16.msra.mxu0 0
        %2105 = vmatprep.subr.bf16.mxu0 0
        %2106 = vmatpush1.bf16.msra.mxu0 0
        %2107 = vmatprep.subr.bf16.mxu0 0
        %2108 = vmatpush1.bf16.msra.mxu0 0
        %2109 = vmatprep.subr.bf16.mxu0 0
        %2110 = vmatpush1.bf16.msra.mxu0 0
        %2111 = vmatprep.subr.bf16.mxu0 0
        %2112 = vmatpush1.bf16.msra.mxu0 0
        %2113 = vmatprep.subr.bf16.mxu0 0
        %2114 = vmatpush1.bf16.msra.mxu0 0
        %2115 = vmatprep.subr.bf16.mxu0 0
        %2116 = vmatpush1.bf16.msra.mxu0 0
        %2117 = vmatprep.subr.bf16.mxu0 0
        %2118 = vmatpush1.bf16.msra.mxu0 0
        %2119 = vmatprep.subr.bf16.mxu0 0
        %2120 = vmatpush1.bf16.msra.mxu0 0
        %2121 = vmatprep.subr.bf16.mxu0 0
        %2122 = vmatpush1.bf16.msra.mxu0 0
        %2123 = vmatprep.mubr.bf16.mxu0 0
        %2124 = vmatmul.mubr.bf16.gmra.mrb[0].mxu0 %v1740
        %v2125 = vpop.f32.mrb[0].mxu0
        %v2126 = vadd.f32 %v2090, %v2125
        %v2127 = vpop.f32.mrb[0].mxu0
        %v2128 = vpop.f32.mrb[0].mxu0
        %v2129 = vpop.f32.mrb[0].mxu0
        %2130 = vdwg.mxu0
        %v2131 = vmax.f32 %v2126, 0.0
        %s2132 = sadd.s32 %s1733, 7
        %s2133 = sld [smem:[#allocation12 + %s2132]]
        %v2134 = vstv %s2133
        %v2135 = vmul.f32 %v2134, %v2131
        %v2136 = vadd.f32 %v2086, %v2135
        %v2137 = vlaneseq
        %v2138 = vshrl.u32 %v2137, 7
        %v2139 = vsub.s32 0, %v2138
        %v2140 = vrot.slane %v1729, %v2139
        %2141 = vmatprep.subr.bf16.mxu0 0
        %2142 = vmatpush1.bf16.msra.mxu0 %v1651
        %2143 = vmatprep.subr.bf16.mxu0 0
        %2144 = vmatpush1.bf16.msra.mxu0 %v1652
        %2145 = vmatprep.subr.bf16.mxu0 0
        %2146 = vmatpush1.bf16.msra.mxu0 %v1653
        %2147 = vmatprep.subr.bf16.mxu0 0
        %2148 = vmatpush1.bf16.msra.mxu0 %v1654
        %2149 = vmatprep.subr.bf16.mxu0 0
        %2150 = vmatpush1.bf16.msra.mxu0 0
        %2151 = vmatprep.subr.bf16.mxu0 0
        %2152 = vmatpush1.bf16.msra.mxu0 0
        %2153 = vmatprep.subr.bf16.mxu0 0
        %2154 = vmatpush1.bf16.msra.mxu0 0
        %2155 = vmatprep.subr.bf16.mxu0 0
        %2156 = vmatpush1.bf16.msra.mxu0 0
        %2157 = vmatprep.subr.bf16.mxu0 0
        %2158 = vmatpush1.bf16.msra.mxu0 0
        %2159 = vmatprep.subr.bf16.mxu0 0
        %2160 = vmatpush1.bf16.msra.mxu0 0
        %2161 = vmatprep.subr.bf16.mxu0 0
        %2162 = vmatpush1.bf16.msra.mxu0 0
        %2163 = vmatprep.subr.bf16.mxu0 0
        %2164 = vmatpush1.bf16.msra.mxu0 0
        %2165 = vmatprep.subr.bf16.mxu0 0
        %2166 = vmatpush1.bf16.msra.mxu0 0
        %2167 = vmatprep.subr.bf16.mxu0 0
        %2168 = vmatpush1.bf16.msra.mxu0 0
        %2169 = vmatprep.subr.bf16.mxu0 0
        %2170 = vmatpush1.bf16.msra.mxu0 0
        %2171 = vmatprep.subr.bf16.mxu0 0
        %2172 = vmatpush1.bf16.msra.mxu0 0
        %2173 = vmatprep.mubr.bf16.mxu0 0
        %2174 = vmatmul.mubr.bf16.gmra.mrb[0].mxu0 %v1740
        %v2175 = vpop.f32.mrb[0].mxu0
        %v2176 = vadd.f32 %v2140, %v2175
        %v2177 = vpop.f32.mrb[0].mxu0
        %v2178 = vpop.f32.mrb[0].mxu0
        %v2179 = vpop.f32.mrb[0].mxu0
        %2180 = vdwg.mxu0
        %v2181 = vmax.f32 %v2176, 0.0
        %s2182 = sadd.s32 %s1733, 8
        %s2183 = sld [smem:[#allocation12 + %s2182]]
        %v2184 = vstv %s2183
        %v2185 = vmul.f32 %v2184, %v2181
        %v2186 = vadd.f32 %v2136, %v2185
        %v2187 = vlaneseq
        %v2188 = vshrl.u32 %v2187, 7
        %v2189 = vsub.s32 1, %v2188
        %v2190 = vrot.slane %v1729, %v2189
        %2191 = vmatprep.subr.bf16.mxu0 0
        %2192 = vmatpush1.bf16.msra.mxu0 %v1655
        %2193 = vmatprep.subr.bf16.mxu0 0
        %2194 = vmatpush1.bf16.msra.mxu0 %v1656
        %2195 = vmatprep.subr.bf16.mxu0 0
        %2196 = vmatpush1.bf16.msra.mxu0 %v1657
        %2197 = vmatprep.subr.bf16.mxu0 0
        %2198 = vmatpush1.bf16.msra.mxu0 %v1658
        %2199 = vmatprep.subr.bf16.mxu0 0
        %2200 = vmatpush1.bf16.msra.mxu0 0
        %2201 = vmatprep.subr.bf16.mxu0 0
        %2202 = vmatpush1.bf16.msra.mxu0 0
        %2203 = vmatprep.subr.bf16.mxu0 0
        %2204 = vmatpush1.bf16.msra.mxu0 0
        %2205 = vmatprep.subr.bf16.mxu0 0
        %2206 = vmatpush1.bf16.msra.mxu0 0
        %2207 = vmatprep.subr.bf16.mxu0 0
        %2208 = vmatpush1.bf16.msra.mxu0 0
        %2209 = vmatprep.subr.bf16.mxu0 0
        %2210 = vmatpush1.bf16.msra.mxu0 0
        %2211 = vmatprep.subr.bf16.mxu0 0
        %2212 = vmatpush1.bf16.msra.mxu0 0
        %2213 = vmatprep.subr.bf16.mxu0 0
        %2214 = vmatpush1.bf16.msra.mxu0 0
        %2215 = vmatprep.subr.bf16.mxu0 0
        %2216 = vmatpush1.bf16.msra.mxu0 0
        %2217 = vmatprep.subr.bf16.mxu0 0
        %2218 = vmatpush1.bf16.msra.mxu0 0
        %2219 = vmatprep.subr.bf16.mxu0 0
        %2220 = vmatpush1.bf16.msra.mxu0 0
        %2221 = vmatprep.subr.bf16.mxu0 0
        %2222 = vmatpush1.bf16.msra.mxu0 0
        %2223 = vmatprep.mubr.bf16.mxu0 0
        %2224 = vmatmul.mubr.bf16.gmra.mrb[0].mxu0 %v1740
        %v2225 = vpop.f32.mrb[0].mxu0
        %v2226 = vadd.f32 %v2190, %v2225
        %v2227 = vpop.f32.mrb[0].mxu0
        %v2228 = vpop.f32.mrb[0].mxu0
        %v2229 = vpop.f32.mrb[0].mxu0
        %2230 = vdwg.mxu0
        %v2231 = vmax.f32 %v2226, 0.0
        %s2232 = sadd.s32 %s1733, 9
        %s2233 = sld [smem:[#allocation12 + %s2232]]
        %v2234 = vstv %s2233
        %v2235 = vmul.f32 %v2234, %v2231
        %v2236 = vadd.f32 %v2186, %v2235
        %v2237 = vlaneseq
        %v2238 = vshrl.u32 %v2237, 7
        %v2239 = vsub.s32 2, %v2238
        %v2240 = vrot.slane %v1729, %v2239
        %2241 = vmatprep.subr.bf16.mxu0 0
        %2242 = vmatpush1.bf16.msra.mxu0 %v1659
        %2243 = vmatprep.subr.bf16.mxu0 0
        %2244 = vmatpush1.bf16.msra.mxu0 %v1660
        %2245 = vmatprep.subr.bf16.mxu0 0
        %2246 = vmatpush1.bf16.msra.mxu0 %v1661
        %2247 = vmatprep.subr.bf16.mxu0 0
        %2248 = vmatpush1.bf16.msra.mxu0 %v1662
        %2249 = vmatprep.subr.bf16.mxu0 0
        %2250 = vmatpush1.bf16.msra.mxu0 0
        %2251 = vmatprep.subr.bf16.mxu0 0
        %2252 = vmatpush1.bf16.msra.mxu0 0
        %2253 = vmatprep.subr.bf16.mxu0 0
        %2254 = vmatpush1.bf16.msra.mxu0 0
        %2255 = vmatprep.subr.bf16.mxu0 0
        %2256 = vmatpush1.bf16.msra.mxu0 0
        %2257 = vmatprep.subr.bf16.mxu0 0
        %2258 = vmatpush1.bf16.msra.mxu0 0
        %2259 = vmatprep.subr.bf16.mxu0 0
        %2260 = vmatpush1.bf16.msra.mxu0 0
        %2261 = vmatprep.subr.bf16.mxu0 0
        %2262 = vmatpush1.bf16.msra.mxu0 0
        %2263 = vmatprep.subr.bf16.mxu0 0
        %2264 = vmatpush1.bf16.msra.mxu0 0
        %2265 = vmatprep.subr.bf16.mxu0 0
        %2266 = vmatpush1.bf16.msra.mxu0 0
        %2267 = vmatprep.subr.bf16.mxu0 0
        %2268 = vmatpush1.bf16.msra.mxu0 0
        %2269 = vmatprep.subr.bf16.mxu0 0
        %2270 = vmatpush1.bf16.msra.mxu0 0
        %2271 = vmatprep.subr.bf16.mxu0 0
        %2272 = vmatpush1.bf16.msra.mxu0 0
        %2273 = vmatprep.mubr.bf16.mxu0 0
        %2274 = vmatmul.mubr.bf16.gmra.mrb[0].mxu0 %v1740
        %v2275 = vpop.f32.mrb[0].mxu0
        %v2276 = vadd.f32 %v2240, %v2275
        %v2277 = vpop.f32.mrb[0].mxu0
        %v2278 = vpop.f32.mrb[0].mxu0
        %v2279 = vpop.f32.mrb[0].mxu0
        %2280 = vdwg.mxu0
        %v2281 = vmax.f32 %v2276, 0.0
        %s2282 = sadd.s32 %s1733, 10
        %s2283 = sld [smem:[#allocation12 + %s2282]]
        %v2284 = vstv %s2283
        %v2285 = vmul.f32 %v2284, %v2281
        %v2286 = vadd.f32 %v2236, %v2285
        %v2287 = vlaneseq
        %v2288 = vshrl.u32 %v2287, 7
        %v2289 = vsub.s32 3, %v2288
        %v2290 = vrot.slane %v1729, %v2289
        %2291 = vmatprep.subr.bf16.mxu0 0
        %2292 = vmatpush1.bf16.msra.mxu0 %v1663
        %2293 = vmatprep.subr.bf16.mxu0 0
        %2294 = vmatpush1.bf16.msra.mxu0 %v1664
        %2295 = vmatprep.subr.bf16.mxu0 0
        %2296 = vmatpush1.bf16.msra.mxu0 %v1665
        %2297 = vmatprep.subr.bf16.mxu0 0
        %2298 = vmatpush1.bf16.msra.mxu0 %v1666
        %2299 = vmatprep.subr.bf16.mxu0 0
        %2300 = vmatpush1.bf16.msra.mxu0 0
        %2301 = vmatprep.subr.bf16.mxu0 0
        %2302 = vmatpush1.bf16.msra.mxu0 0
        %2303 = vmatprep.subr.bf16.mxu0 0
        %2304 = vmatpush1.bf16.msra.mxu0 0
        %2305 = vmatprep.subr.bf16.mxu0 0
        %2306 = vmatpush1.bf16.msra.mxu0 0
        %2307 = vmatprep.subr.bf16.mxu0 0
        %2308 = vmatpush1.bf16.msra.mxu0 0
        %2309 = vmatprep.subr.bf16.mxu0 0
        %2310 = vmatpush1.bf16.msra.mxu0 0
        %2311 = vmatprep.subr.bf16.mxu0 0
        %2312 = vmatpush1.bf16.msra.mxu0 0
        %2313 = vmatprep.subr.bf16.mxu0 0
        %2314 = vmatpush1.bf16.msra.mxu0 0
        %2315 = vmatprep.subr.bf16.mxu0 0
        %2316 = vmatpush1.bf16.msra.mxu0 0
        %2317 = vmatprep.subr.bf16.mxu0 0
        %2318 = vmatpush1.bf16.msra.mxu0 0
        %2319 = vmatprep.subr.bf16.mxu0 0
        %2320 = vmatpush1.bf16.msra.mxu0 0
        %2321 = vmatprep.subr.bf16.mxu0 0
        %2322 = vmatpush1.bf16.msra.mxu0 0
        %2323 = vmatprep.mubr.bf16.mxu0 0
        %2324 = vmatmul.mubr.bf16.gmra.mrb[0].mxu0 %v1740
        %v2325 = vpop.f32.mrb[0].mxu0
        %v2326 = vadd.f32 %v2290, %v2325
        %v2327 = vpop.f32.mrb[0].mxu0
        %v2328 = vpop.f32.mrb[0].mxu0
        %v2329 = vpop.f32.mrb[0].mxu0
        %2330 = vdwg.mxu0
        %v2331 = vmax.f32 %v2326, 0.0
        %s2332 = sadd.s32 %s1733, 11
        %s2333 = sld [smem:[#allocation12 + %s2332]]
        %v2334 = vstv %s2333
        %v2335 = vmul.f32 %v2334, %v2331
        %v2336 = vadd.f32 %v2286, %v2335
        %v2337 = vlaneseq
        %v2338 = vshrl.u32 %v2337, 7
        %v2339 = vsub.s32 4, %v2338
        %v2340 = vrot.slane %v1729, %v2339
        %2341 = vmatprep.subr.bf16.mxu0 0
        %2342 = vmatpush1.bf16.msra.mxu0 %v1667
        %2343 = vmatprep.subr.bf16.mxu0 0
        %2344 = vmatpush1.bf16.msra.mxu0 %v1668
        %2345 = vmatprep.subr.bf16.mxu0 0
        %2346 = vmatpush1.bf16.msra.mxu0 %v1669
        %2347 = vmatprep.subr.bf16.mxu0 0
        %2348 = vmatpush1.bf16.msra.mxu0 %v1670
        %2349 = vmatprep.subr.bf16.mxu0 0
        %2350 = vmatpush1.bf16.msra.mxu0 0
        %2351 = vmatprep.subr.bf16.mxu0 0
        %2352 = vmatpush1.bf16.msra.mxu0 0
        %2353 = vmatprep.subr.bf16.mxu0 0
        %2354 = vmatpush1.bf16.msra.mxu0 0
        %2355 = vmatprep.subr.bf16.mxu0 0
        %2356 = vmatpush1.bf16.msra.mxu0 0
        %2357 = vmatprep.subr.bf16.mxu0 0
        %2358 = vmatpush1.bf16.msra.mxu0 0
        %2359 = vmatprep.subr.bf16.mxu0 0
        %2360 = vmatpush1.bf16.msra.mxu0 0
        %2361 = vmatprep.subr.bf16.mxu0 0
        %2362 = vmatpush1.bf16.msra.mxu0 0
        %2363 = vmatprep.subr.bf16.mxu0 0
        %2364 = vmatpush1.bf16.msra.mxu0 0
        %2365 = vmatprep.subr.bf16.mxu0 0
        %2366 = vmatpush1.bf16.msra.mxu0 0
        %2367 = vmatprep.subr.bf16.mxu0 0
        %2368 = vmatpush1.bf16.msra.mxu0 0
        %2369 = vmatprep.subr.bf16.mxu0 0
        %2370 = vmatpush1.bf16.msra.mxu0 0
        %2371 = vmatprep.subr.bf16.mxu0 0
        %2372 = vmatpush1.bf16.msra.mxu0 0
        %2373 = vmatprep.mubr.bf16.mxu0 0
        %2374 = vmatmul.mubr.bf16.gmra.mrb[0].mxu0 %v1740
        %v2375 = vpop.f32.mrb[0].mxu0
        %v2376 = vadd.f32 %v2340, %v2375
        %v2377 = vpop.f32.mrb[0].mxu0
        %v2378 = vpop.f32.mrb[0].mxu0
        %v2379 = vpop.f32.mrb[0].mxu0
        %2380 = vdwg.mxu0
        %v2381 = vmax.f32 %v2376, 0.0
        %s2382 = sadd.s32 %s1733, 12
        %s2383 = sld [smem:[#allocation12 + %s2382]]
        %v2384 = vstv %s2383
        %v2385 = vmul.f32 %v2384, %v2381
        %v2386 = vadd.f32 %v2336, %v2385
        %v2387 = vlaneseq
        %v2388 = vshrl.u32 %v2387, 7
        %v2389 = vsub.s32 5, %v2388
        %v2390 = vrot.slane %v1729, %v2389
        %2391 = vmatprep.subr.bf16.mxu0 0
        %2392 = vmatpush1.bf16.msra.mxu0 %v1671
        %2393 = vmatprep.subr.bf16.mxu0 0
        %2394 = vmatpush1.bf16.msra.mxu0 %v1672
        %2395 = vmatprep.subr.bf16.mxu0 0
        %2396 = vmatpush1.bf16.msra.mxu0 %v1673
        %2397 = vmatprep.subr.bf16.mxu0 0
        %2398 = vmatpush1.bf16.msra.mxu0 %v1674
        %2399 = vmatprep.subr.bf16.mxu0 0
        %2400 = vmatpush1.bf16.msra.mxu0 0
        %2401 = vmatprep.subr.bf16.mxu0 0
        %2402 = vmatpush1.bf16.msra.mxu0 0
        %2403 = vmatprep.subr.bf16.mxu0 0
        %2404 = vmatpush1.bf16.msra.mxu0 0
        %2405 = vmatprep.subr.bf16.mxu0 0
        %2406 = vmatpush1.bf16.msra.mxu0 0
        %2407 = vmatprep.subr.bf16.mxu0 0
        %2408 = vmatpush1.bf16.msra.mxu0 0
        %2409 = vmatprep.subr.bf16.mxu0 0
        %2410 = vmatpush1.bf16.msra.mxu0 0
        %2411 = vmatprep.subr.bf16.mxu0 0
        %2412 = vmatpush1.bf16.msra.mxu0 0
        %2413 = vmatprep.subr.bf16.mxu0 0
        %2414 = vmatpush1.bf16.msra.mxu0 0
        %2415 = vmatprep.subr.bf16.mxu0 0
        %2416 = vmatpush1.bf16.msra.mxu0 0
        %2417 = vmatprep.subr.bf16.mxu0 0
        %2418 = vmatpush1.bf16.msra.mxu0 0
        %2419 = vmatprep.subr.bf16.mxu0 0
        %2420 = vmatpush1.bf16.msra.mxu0 0
        %2421 = vmatprep.subr.bf16.mxu0 0
        %2422 = vmatpush1.bf16.msra.mxu0 0
        %2423 = vmatprep.mubr.bf16.mxu0 0
        %2424 = vmatmul.mubr.bf16.gmra.mrb[0].mxu0 %v1740
        %v2425 = vpop.f32.mrb[0].mxu0
        %v2426 = vadd.f32 %v2390, %v2425
        %v2427 = vpop.f32.mrb[0].mxu0
        %v2428 = vpop.f32.mrb[0].mxu0
        %v2429 = vpop.f32.mrb[0].mxu0
        %2430 = vdwg.mxu0
        %v2431 = vmax.f32 %v2426, 0.0
        %s2432 = sadd.s32 %s1733, 13
        %s2433 = sld [smem:[#allocation12 + %s2432]]
        %v2434 = vstv %s2433
        %v2435 = vmul.f32 %v2434, %v2431
        %v2436 = vadd.f32 %v2386, %v2435
        %v2437 = vlaneseq
        %v2438 = vshrl.u32 %v2437, 7
        %v2439 = vsub.s32 6, %v2438
        %v2440 = vrot.slane %v1729, %v2439
        %2441 = vmatprep.subr.bf16.mxu0 0
        %2442 = vmatpush1.bf16.msra.mxu0 %v1675
        %2443 = vmatprep.subr.bf16.mxu0 0
        %2444 = vmatpush1.bf16.msra.mxu0 %v1676
        %2445 = vmatprep.subr.bf16.mxu0 0
        %2446 = vmatpush1.bf16.msra.mxu0 %v1677
        %2447 = vmatprep.subr.bf16.mxu0 0
        %2448 = vmatpush1.bf16.msra.mxu0 %v1678
        %2449 = vmatprep.subr.bf16.mxu0 0
        %2450 = vmatpush1.bf16.msra.mxu0 0
        %2451 = vmatprep.subr.bf16.mxu0 0
        %2452 = vmatpush1.bf16.msra.mxu0 0
        %2453 = vmatprep.subr.bf16.mxu0 0
        %2454 = vmatpush1.bf16.msra.mxu0 0
        %2455 = vmatprep.subr.bf16.mxu0 0
        %2456 = vmatpush1.bf16.msra.mxu0 0
        %2457 = vmatprep.subr.bf16.mxu0 0
        %2458 = vmatpush1.bf16.msra.mxu0 0
        %2459 = vmatprep.subr.bf16.mxu0 0
        %2460 = vmatpush1.bf16.msra.mxu0 0
        %2461 = vmatprep.subr.bf16.mxu0 0
        %2462 = vmatpush1.bf16.msra.mxu0 0
        %2463 = vmatprep.subr.bf16.mxu0 0
        %2464 = vmatpush1.bf16.msra.mxu0 0
        %2465 = vmatprep.subr.bf16.mxu0 0
        %2466 = vmatpush1.bf16.msra.mxu0 0
        %2467 = vmatprep.subr.bf16.mxu0 0
        %2468 = vmatpush1.bf16.msra.mxu0 0
        %2469 = vmatprep.subr.bf16.mxu0 0
        %2470 = vmatpush1.bf16.msra.mxu0 0
        %2471 = vmatprep.subr.bf16.mxu0 0
        %2472 = vmatpush1.bf16.msra.mxu0 0
        %2473 = vmatprep.mubr.bf16.mxu0 0
        %2474 = vmatmul.mubr.bf16.gmra.mrb[0].mxu0 %v1740
        %v2475 = vpop.f32.mrb[0].mxu0
        %v2476 = vadd.f32 %v2440, %v2475
        %v2477 = vpop.f32.mrb[0].mxu0
        %v2478 = vpop.f32.mrb[0].mxu0
        %v2479 = vpop.f32.mrb[0].mxu0
        %2480 = vdwg.mxu0
        %v2481 = vmax.f32 %v2476, 0.0
        %s2482 = sadd.s32 %s1733, 14
        %s2483 = sld [smem:[#allocation12 + %s2482]]
        %v2484 = vstv %s2483
        %v2485 = vmul.f32 %v2484, %v2481
        %v2486 = vadd.f32 %v2436, %v2485
        %v2487 = vlaneseq
        %v2488 = vshrl.u32 %v2487, 7
        %v2489 = vsub.s32 7, %v2488
        %v2490 = vrot.slane %v1729, %v2489
        %2491 = vmatprep.subr.bf16.mxu0 0
        %2492 = vmatpush1.bf16.msra.mxu0 %v1679
        %2493 = vmatprep.subr.bf16.mxu0 0
        %2494 = vmatpush1.bf16.msra.mxu0 %v1680
        %2495 = vmatprep.subr.bf16.mxu0 0
        %2496 = vmatpush1.bf16.msra.mxu0 %v1681
        %2497 = vmatprep.subr.bf16.mxu0 0
        %2498 = vmatpush1.bf16.msra.mxu0 %v1682
        %2499 = vmatprep.subr.bf16.mxu0 0
        %2500 = vmatpush1.bf16.msra.mxu0 0
        %2501 = vmatprep.subr.bf16.mxu0 0
        %2502 = vmatpush1.bf16.msra.mxu0 0
        %2503 = vmatprep.subr.bf16.mxu0 0
        %2504 = vmatpush1.bf16.msra.mxu0 0
        %2505 = vmatprep.subr.bf16.mxu0 0
        %2506 = vmatpush1.bf16.msra.mxu0 0
        %2507 = vmatprep.subr.bf16.mxu0 0
        %2508 = vmatpush1.bf16.msra.mxu0 0
        %2509 = vmatprep.subr.bf16.mxu0 0
        %2510 = vmatpush1.bf16.msra.mxu0 0
        %2511 = vmatprep.subr.bf16.mxu0 0
        %2512 = vmatpush1.bf16.msra.mxu0 0
        %2513 = vmatprep.subr.bf16.mxu0 0
        %2514 = vmatpush1.bf16.msra.mxu0 0
        %2515 = vmatprep.subr.bf16.mxu0 0
        %2516 = vmatpush1.bf16.msra.mxu0 0
        %2517 = vmatprep.subr.bf16.mxu0 0
        %2518 = vmatpush1.bf16.msra.mxu0 0
        %2519 = vmatprep.subr.bf16.mxu0 0
        %2520 = vmatpush1.bf16.msra.mxu0 0
        %2521 = vmatprep.subr.bf16.mxu0 0
        %2522 = vmatpush1.bf16.msra.mxu0 0
        %2523 = vmatprep.mubr.bf16.mxu0 0
        %2524 = vmatmul.mubr.bf16.gmra.mrb[0].mxu0 %v1740
        %v2525 = vpop.f32.mrb[0].mxu0
        %v2526 = vadd.f32 %v2490, %v2525
        %v2527 = vpop.f32.mrb[0].mxu0
        %v2528 = vpop.f32.mrb[0].mxu0
        %v2529 = vpop.f32.mrb[0].mxu0
        %2530 = vdwg.mxu0
        %v2531 = vmax.f32 %v2526, 0.0
        %s2532 = sadd.s32 %s1733, 15
        %s2533 = sld [smem:[#allocation12 + %s2532]]
        %v2534 = vstv %s2533
        %v2535 = vmul.f32 %v2534, %v2531
        %v2536 = vadd.f32 %v2486, %v2535
        %2537 = vst [vmem:[#allocation2] sm:$0xff] %v2536
        %p2538 = scmp.eq.s32.totalorder %s27, 1
        // Predicated region
        $region69: #{tpu_custom_call.1} parent=43 // pred_check
          %p2539 = pneg %p2538
        $region70: #{tpu_custom_call.1} parent=43 // pred_check_branch
          %2541 = sbr.rel (%p2539) target = $region72
        $region71: #{tpu_custom_call.1} parent=43 // pred_region
          %v2542 = vld [vmem:[#allocation2] sm:$0xff]
          %s2543 = sld [smem:[#allocation3]]
          %v2544 = vstv %s2543
          %v2545 = vadd.f32 %v2542, %v2544
          %2546 = vst [vmem:[#allocation13] sm:$0xff] %v2545
        $region72: #{tpu_custom_call.1} parent=43 // pred_fallthru
          _
        // Predicated region
        $region73: #{tpu_custom_call.1} parent=43 // pred_check
          %p2547 = pneg %p193
        $region74: #{tpu_custom_call.1} parent=43 // pred_check_branch
          %2549 = sbr.rel (%p2547) target = $region76
        $region75: #{tpu_custom_call.1} parent=43 // pred_region
          %s2551 = ssub.s32 128, 128
          %2552 = vsyncadd [#allocation6], %s2551
          %s2553 = smul.addr %s26, 128
          %s2554 = scalar_lea.hbm %s6, %s2553
          %s2556 = sshll.u32 [#allocation13], 4
          %s2557 = int_to_ptr.vmem [resolvable:$true] %s2556
          %2559 = dma.vmem_to_hbm [thread:$0]  %s2557, 128, %s2554, [#allocation6]
        $region76: #{tpu_custom_call.1} parent=43 // pred_fallthru
          _
        // Predicated region
        $region77: #{tpu_custom_call.1} parent=43 // pred_check
          %p2560 = pneg %p193
        $region78: #{tpu_custom_call.1} parent=43 // pred_check_branch
          %2562 = sbr.rel (%p2560) target = $region80
        $region79: #{tpu_custom_call.1} parent=43 // pred_region
          %2563 = dma.done [#allocation6], 128
        $region80: #{tpu_custom_call.1} parent=43 // pred_fallthru
          _
      $region44: #{tpu_custom_call.1} parent=5 // pred_fallthru
        _
      %p2564 = scmp.le.s32.totalorder 2, %s17
      // Predicated region
      $region81: #{tpu_custom_call.1} parent=5 // pred_check
        %p2565 = pneg %p2564
      $region82: #{tpu_custom_call.1} parent=5 // pred_check_branch
        %2567 = sbr.rel (%p2565) target = $region84
      $region83: #{tpu_custom_call.1} parent=5 // pred_region
        %s2568 = ssub.s32 %s17, 2
      $region84: #{tpu_custom_call.1} parent=5 // pred_fallthru
        _
    $region6: #{tpu_custom_call.1} parent=1 // loop_footer
      %s21 = sadd.s32 1, %s17
    $region7: #{tpu_custom_call.1} parent=1 // loop_footer_branch
      %16 = sbr.rel target = $region3
    $region8: #{tpu_custom_call.1} parent=1 // loop_exit
      _
    %2569 = vsyncpa [#allocation5], 1
    %s2570 = scalar_lea.sflag [#allocation5], 1
    %2571 = vsyncpa %s2570, 1
    %2572 = vsyncpa [#allocation9], 1
    %2573 = vsyncpa [#allocation6], 1
    %s2574 = scalar_lea.sflag [#allocation6], 1
    %2575 = vsyncpa %s2574, 1
    %2576 = vsyncpa [#allocation7], 1
    %s2577 = scalar_lea.sflag [#allocation7], 1
    %2578 = vsyncpa %s2577, 1

</llo_original>
